<compile_context>
chip_gen: v7x
topology: tpu7x:2x2x1
jax: 0.10.0
libtpu: 0.0.40
codegen_flags: <defaults>
</compile_context>

<pallas_src>
import functools

import jax
import jax.numpy as jnp
from jax.experimental import pallas as pl
from jax.experimental.pallas import tpu as pltpu

HIDDEN = 128  # nn.LSTM(latent_dim, 128)


def _generator_kernel(x2d_ref, wih_ref, whh_ref, b_ref, wfc_ref, bfc_ref,
                      out_ref, *, seq_len, batch_pad):
    H = HIDDEN

    # Hoisted input projection for ALL time steps in one MXU pass:
    # (T*Bp, D) @ (D, 4H) + (1, 4H)  ->  (T*Bp, 4H)
    gates_x = (jnp.dot(x2d_ref[...], wih_ref[...],
                       preferred_element_type=jnp.float32)
               + b_ref[...])

    whh = whh_ref[...]                                        # (H, 4H)
    h = jnp.zeros((batch_pad, H), jnp.float32)
    c = jnp.zeros((batch_pad, H), jnp.float32)

    # Statically unrolled time recurrence (seq_len is small & known at trace time).
    for t in range(seq_len):
        g = (gates_x[t * batch_pad:(t + 1) * batch_pad, :]
             + jnp.dot(h, whh, preferred_element_type=jnp.float32))  # (Bp, 4H)
        i_g = jax.nn.sigmoid(g[:, 0 * H:1 * H])
        f_g = jax.nn.sigmoid(g[:, 1 * H:2 * H])
        g_g = jnp.tanh(g[:, 2 * H:3 * H])
        o_g = jax.nn.sigmoid(g[:, 3 * H:4 * H])
        c = f_g * c + i_g * g_g
        h = o_g * jnp.tanh(c)

    # relu(last hidden) -> fc -> softmax over the (padded, lane-dense) city axis.
    hr = jnp.maximum(h, 0.0)
    logits = (jnp.dot(hr, wfc_ref[...], preferred_element_type=jnp.float32)
              + bfc_ref[...])                                 # (Bp, Np); pad cols ~ -1e30
    m = jnp.max(logits, axis=-1, keepdims=True)
    e = jnp.exp(logits - m)                                   # padded cols underflow to 0
    s = jnp.sum(e, axis=-1, keepdims=True)
    out_ref[...] = e * pl.reciprocal(s, approx=False)


def generator_forward(x_btd, w_ih, w_hh, b_ih, b_hh, w_fc, b_fc):
    """x_btd: (B, T, D) float32. Returns (B, n_cities) softmax probabilities."""
    B, T, D = x_btd.shape
    H = HIDDEN
    n_cities = w_fc.shape[0]

    # Pad batch to a sublane multiple (>=8) and the output to full 128 lanes.
    Bp = max(8, -(-B // 8) * 8)
    Np = -(-n_cities // 128) * 128

    # Time-major, batch-padded, flattened to (T*Bp, D) for one input-projection matmul.
    x_tbd = jnp.transpose(x_btd, (1, 0, 2)).astype(jnp.float32)      # (T, B, D)
    x_pad = jnp.pad(x_tbd, ((0, 0), (0, Bp - B), (0, 0)))            # (T, Bp, D)
    x2d = x_pad.reshape(T * Bp, D)

    wih_t = jnp.transpose(w_ih).astype(jnp.float32)                  # (D, 4H)
    whh_t = jnp.transpose(w_hh).astype(jnp.float32)                  # (H, 4H)
    b = (b_ih + b_hh).reshape(1, 4 * H).astype(jnp.float32)          # (1, 4H)

    wfc_t = jnp.pad(jnp.transpose(w_fc).astype(jnp.float32),
                    ((0, 0), (0, Np - n_cities)))                    # (H, Np)
    bfc = jnp.pad(b_fc.astype(jnp.float32), (0, Np - n_cities),
                  constant_values=-1e30).reshape(1, Np)              # (1, Np)

    kernel = functools.partial(_generator_kernel, seq_len=T, batch_pad=Bp)

    vmem_spec = pl.BlockSpec(memory_space=pltpu.MemorySpace.VMEM)
    out_pad = pl.pallas_call(
        kernel,
        out_shape=jax.ShapeDtypeStruct((Bp, Np), jnp.float32),
        in_specs=[vmem_spec] * 6,
        out_specs=vmem_spec,
    )(x2d, wih_t, whh_t, b, wfc_t, bfc)

    return out_pad[:B, :n_cities]


def _reference_forward(x_btd, w_ih, w_hh, b_ih, b_hh, w_fc, b_fc):
    """Pure-JAX reference mirroring the PyTorch forward."""
    B, T, D = x_btd.shape
    H = HIDDEN

    def step(carry, x_t):
        h, c = carry
        gates = x_t @ w_ih.T + b_ih + h @ w_hh.T + b_hh
        i = jax.nn.sigmoid(gates[:, 0 * H:1 * H])
        f = jax.nn.sigmoid(gates[:, 1 * H:2 * H])
        g = jnp.tanh(gates[:, 2 * H:3 * H])
        o = jax.nn.sigmoid(gates[:, 3 * H:4 * H])
        c = f * c + i * g
        h = o * jnp.tanh(c)
        return (h, c), h

    init = (jnp.zeros((B, H), jnp.float32), jnp.zeros((B, H), jnp.float32))
    (h_last, _), _ = jax.lax.scan(step, init, jnp.transpose(x_btd, (1, 0, 2)))
    hr = jnp.maximum(h_last, 0.0)
    logits = hr @ w_fc.T + b_fc
    return jax.nn.softmax(logits, axis=1)


if __name__ == "__main__":
    # Small shapes implied by the forward: batch=2, seq=8, latent_dim=32, n_cities=10
    B, T, latent_dim, n_cities = 2, 8, 32, 10
    H = HIDDEN

    key = jax.random.PRNGKey(0)
    k_x, k_wih, k_whh, k_bih, k_bhh, k_wfc = jax.random.split(key, 6)

    x = jax.random.normal(k_x, (B, T, latent_dim), dtype=jnp.float32)

    # LSTM params: PyTorch default init is U(-1/sqrt(H), 1/sqrt(H))
    s = 1.0 / jnp.sqrt(jnp.float32(H))
    w_ih = jax.random.uniform(k_wih, (4 * H, latent_dim), minval=-s, maxval=s, dtype=jnp.float32)
    w_hh = jax.random.uniform(k_whh, (4 * H, H), minval=-s, maxval=s, dtype=jnp.float32)
    b_ih = jax.random.uniform(k_bih, (4 * H,), minval=-s, maxval=s, dtype=jnp.float32)
    b_hh = jax.random.uniform(k_bhh, (4 * H,), minval=-s, maxval=s, dtype=jnp.float32)

    # fc: xavier_normal_ weight, zero bias (init_weights)
    xavier_std = jnp.sqrt(2.0 / jnp.float32(H + n_cities))
    w_fc = jax.random.normal(k_wfc, (n_cities, H), dtype=jnp.float32) * xavier_std
    b_fc = jnp.zeros((n_cities,), dtype=jnp.float32)

    out = generator_forward(x, w_ih, w_hh, b_ih, b_hh, w_fc, b_fc)
    out = jax.block_until_ready(out)

    ref = _reference_forward(x, w_ih, w_hh, b_ih, b_hh, w_fc, b_fc)
    assert out.shape == (B, n_cities)
    assert jnp.allclose(out, ref, atol=1e-5, rtol=1e-5), "mismatch vs JAX reference"

    print("KERNEL_OK")
</pallas_src>

<mosaic_0001>
module attributes {stable_mosaic.version = 11 : i64} {
  func.func @_generator_kernel(%arg0: memref<64x32xf32, #tpu.memory_space<vmem>>, %arg1: memref<32x512xf32, #tpu.memory_space<vmem>>, %arg2: memref<128x512xf32, #tpu.memory_space<vmem>>, %arg3: memref<1x512xf32, #tpu.memory_space<vmem>>, %arg4: memref<128x128xf32, #tpu.memory_space<vmem>>, %arg5: memref<1x128xf32, #tpu.memory_space<vmem>>, %arg6: memref<8x128xf32, #tpu.memory_space<vmem>>) attributes {dimension_semantics = [], scalar_prefetch = 0 : i64, scratch_operands = 0 : i64, tpu.core_type = #tpu.core_type<tc>} {
    %c0 = arith.constant 0 : index
    %c0_0 = arith.constant 0 : index
    %0 = vector.load %arg0[%c0, %c0_0] : memref<64x32xf32, #tpu.memory_space<vmem>>, vector<64x32xf32>
    %c0_1 = arith.constant 0 : index
    %c0_2 = arith.constant 0 : index
    %1 = vector.load %arg1[%c0_1, %c0_2] : memref<32x512xf32, #tpu.memory_space<vmem>>, vector<32x512xf32>
    %cst = arith.constant dense<0.000000e+00> : vector<64x512xf32>
    %2 = tpu.matmul %0, %1, %cst {dimension_numbers = #tpu.dot_dimension_numbers<[1], [0], [0], [1], [0, 0, 1, 1], [], []>} : vector<64x32xf32>, vector<32x512xf32>, vector<64x512xf32> -> vector<64x512xf32>
    %c0_3 = arith.constant 0 : index
    %c0_4 = arith.constant 0 : index
    %3 = vector.load %arg3[%c0_3, %c0_4] : memref<1x512xf32, #tpu.memory_space<vmem>>, vector<1x512xf32>
    %4 = vector.broadcast %3 : vector<1x512xf32> to vector<64x512xf32>
    %5 = arith.addf %2, %4 : vector<64x512xf32>
    %c0_5 = arith.constant 0 : index
    %c0_6 = arith.constant 0 : index
    %6 = vector.load %arg2[%c0_5, %c0_6] : memref<128x512xf32, #tpu.memory_space<vmem>>, vector<128x512xf32>
    %cst_7 = arith.constant 0.000000e+00 : f32
    %7 = vector.broadcast %cst_7 : f32 to vector<8x128xf32>
    %cst_8 = arith.constant 0.000000e+00 : f32
    %8 = vector.broadcast %cst_8 : f32 to vector<8x128xf32>
    %9 = vector.extract_strided_slice %5 {offsets = [0, 0], sizes = [8, 512], strides = [1, 1]} : vector<64x512xf32> to vector<8x512xf32>
    %cst_9 = arith.constant dense<0.000000e+00> : vector<8x512xf32>
    %10 = tpu.matmul %7, %6, %cst_9 {dimension_numbers = #tpu.dot_dimension_numbers<[1], [0], [0], [1], [0, 0, 1, 1], [], []>} : vector<8x128xf32>, vector<128x512xf32>, vector<8x512xf32> -> vector<8x512xf32>
    %11 = arith.addf %9, %10 : vector<8x512xf32>
    %12 = vector.extract_strided_slice %11 {offsets = [0, 0], sizes = [8, 128], strides = [1, 1]} : vector<8x512xf32> to vector<8x128xf32>
    %13 = arith.negf %12 : vector<8x128xf32>
    %14 = math.exp %13 : vector<8x128xf32>
    %cst_10 = arith.constant 1.000000e+00 : f32
    %15 = vector.broadcast %cst_10 : f32 to vector<8x128xf32>
    %16 = arith.addf %15, %14 : vector<8x128xf32>
    %17 = arith.divf %15, %16 : vector<8x128xf32>
    %18 = vector.extract_strided_slice %11 {offsets = [0, 128], sizes = [8, 128], strides = [1, 1]} : vector<8x512xf32> to vector<8x128xf32>
    %19 = arith.negf %18 : vector<8x128xf32>
    %20 = math.exp %19 : vector<8x128xf32>
    %cst_11 = arith.constant 1.000000e+00 : f32
    %21 = vector.broadcast %cst_11 : f32 to vector<8x128xf32>
    %22 = arith.addf %21, %20 : vector<8x128xf32>
    %23 = arith.divf %21, %22 : vector<8x128xf32>
    %24 = vector.extract_strided_slice %11 {offsets = [0, 256], sizes = [8, 128], strides = [1, 1]} : vector<8x512xf32> to vector<8x128xf32>
    %25 = math.tanh %24 : vector<8x128xf32>
    %26 = vector.extract_strided_slice %11 {offsets = [0, 384], sizes = [8, 128], strides = [1, 1]} : vector<8x512xf32> to vector<8x128xf32>
    %27 = arith.negf %26 : vector<8x128xf32>
    %28 = math.exp %27 : vector<8x128xf32>
    %cst_12 = arith.constant 1.000000e+00 : f32
    %29 = vector.broadcast %cst_12 : f32 to vector<8x128xf32>
    %30 = arith.addf %29, %28 : vector<8x128xf32>
    %31 = arith.divf %29, %30 : vector<8x128xf32>
    %32 = arith.mulf %23, %8 : vector<8x128xf32>
    %33 = arith.mulf %17, %25 : vector<8x128xf32>
    %34 = arith.addf %32, %33 : vector<8x128xf32>
    %35 = math.tanh %34 : vector<8x128xf32>
    %36 = arith.mulf %31, %35 : vector<8x128xf32>
    %37 = vector.extract_strided_slice %5 {offsets = [8, 0], sizes = [8, 512], strides = [1, 1]} : vector<64x512xf32> to vector<8x512xf32>
    %cst_13 = arith.constant dense<0.000000e+00> : vector<8x512xf32>
    %38 = tpu.matmul %36, %6, %cst_13 {dimension_numbers = #tpu.dot_dimension_numbers<[1], [0], [0], [1], [0, 0, 1, 1], [], []>} : vector<8x128xf32>, vector<128x512xf32>, vector<8x512xf32> -> vector<8x512xf32>
    %39 = arith.addf %37, %38 : vector<8x512xf32>
    %40 = vector.extract_strided_slice %39 {offsets = [0, 0], sizes = [8, 128], strides = [1, 1]} : vector<8x512xf32> to vector<8x128xf32>
    %41 = arith.negf %40 : vector<8x128xf32>
    %42 = math.exp %41 : vector<8x128xf32>
    %cst_14 = arith.constant 1.000000e+00 : f32
    %43 = vector.broadcast %cst_14 : f32 to vector<8x128xf32>
    %44 = arith.addf %43, %42 : vector<8x128xf32>
    %45 = arith.divf %43, %44 : vector<8x128xf32>
    %46 = vector.extract_strided_slice %39 {offsets = [0, 128], sizes = [8, 128], strides = [1, 1]} : vector<8x512xf32> to vector<8x128xf32>
    %47 = arith.negf %46 : vector<8x128xf32>
    %48 = math.exp %47 : vector<8x128xf32>
    %cst_15 = arith.constant 1.000000e+00 : f32
    %49 = vector.broadcast %cst_15 : f32 to vector<8x128xf32>
    %50 = arith.addf %49, %48 : vector<8x128xf32>
    %51 = arith.divf %49, %50 : vector<8x128xf32>
    %52 = vector.extract_strided_slice %39 {offsets = [0, 256], sizes = [8, 128], strides = [1, 1]} : vector<8x512xf32> to vector<8x128xf32>
    %53 = math.tanh %52 : vector<8x128xf32>
    %54 = vector.extract_strided_slice %39 {offsets = [0, 384], sizes = [8, 128], strides = [1, 1]} : vector<8x512xf32> to vector<8x128xf32>
    %55 = arith.negf %54 : vector<8x128xf32>
    %56 = math.exp %55 : vector<8x128xf32>
    %cst_16 = arith.constant 1.000000e+00 : f32
    %57 = vector.broadcast %cst_16 : f32 to vector<8x128xf32>
    %58 = arith.addf %57, %56 : vector<8x128xf32>
    %59 = arith.divf %57, %58 : vector<8x128xf32>
    %60 = arith.mulf %51, %34 : vector<8x128xf32>
    %61 = arith.mulf %45, %53 : vector<8x128xf32>
    %62 = arith.addf %60, %61 : vector<8x128xf32>
    %63 = math.tanh %62 : vector<8x128xf32>
    %64 = arith.mulf %59, %63 : vector<8x128xf32>
    %65 = vector.extract_strided_slice %5 {offsets = [16, 0], sizes = [8, 512], strides = [1, 1]} : vector<64x512xf32> to vector<8x512xf32>
    %cst_17 = arith.constant dense<0.000000e+00> : vector<8x512xf32>
    %66 = tpu.matmul %64, %6, %cst_17 {dimension_numbers = #tpu.dot_dimension_numbers<[1], [0], [0], [1], [0, 0, 1, 1], [], []>} : vector<8x128xf32>, vector<128x512xf32>, vector<8x512xf32> -> vector<8x512xf32>
    %67 = arith.addf %65, %66 : vector<8x512xf32>
    %68 = vector.extract_strided_slice %67 {offsets = [0, 0], sizes = [8, 128], strides = [1, 1]} : vector<8x512xf32> to vector<8x128xf32>
    %69 = arith.negf %68 : vector<8x128xf32>
    %70 = math.exp %69 : vector<8x128xf32>
    %cst_18 = arith.constant 1.000000e+00 : f32
    %71 = vector.broadcast %cst_18 : f32 to vector<8x128xf32>
    %72 = arith.addf %71, %70 : vector<8x128xf32>
    %73 = arith.divf %71, %72 : vector<8x128xf32>
    %74 = vector.extract_strided_slice %67 {offsets = [0, 128], sizes = [8, 128], strides = [1, 1]} : vector<8x512xf32> to vector<8x128xf32>
    %75 = arith.negf %74 : vector<8x128xf32>
    %76 = math.exp %75 : vector<8x128xf32>
    %cst_19 = arith.constant 1.000000e+00 : f32
    %77 = vector.broadcast %cst_19 : f32 to vector<8x128xf32>
    %78 = arith.addf %77, %76 : vector<8x128xf32>
    %79 = arith.divf %77, %78 : vector<8x128xf32>
    %80 = vector.extract_strided_slice %67 {offsets = [0, 256], sizes = [8, 128], strides = [1, 1]} : vector<8x512xf32> to vector<8x128xf32>
    %81 = math.tanh %80 : vector<8x128xf32>
    %82 = vector.extract_strided_slice %67 {offsets = [0, 384], sizes = [8, 128], strides = [1, 1]} : vector<8x512xf32> to vector<8x128xf32>
    %83 = arith.negf %82 : vector<8x128xf32>
    %84 = math.exp %83 : vector<8x128xf32>
    %cst_20 = arith.constant 1.000000e+00 : f32
    %85 = vector.broadcast %cst_20 : f32 to vector<8x128xf32>
    %86 = arith.addf %85, %84 : vector<8x128xf32>
    %87 = arith.divf %85, %86 : vector<8x128xf32>
    %88 = arith.mulf %79, %62 : vector<8x128xf32>
    %89 = arith.mulf %73, %81 : vector<8x128xf32>
    %90 = arith.addf %88, %89 : vector<8x128xf32>
    %91 = math.tanh %90 : vector<8x128xf32>
    %92 = arith.mulf %87, %91 : vector<8x128xf32>
    %93 = vector.extract_strided_slice %5 {offsets = [24, 0], sizes = [8, 512], strides = [1, 1]} : vector<64x512xf32> to vector<8x512xf32>
    %cst_21 = arith.constant dense<0.000000e+00> : vector<8x512xf32>
    %94 = tpu.matmul %92, %6, %cst_21 {dimension_numbers = #tpu.dot_dimension_numbers<[1], [0], [0], [1], [0, 0, 1, 1], [], []>} : vector<8x128xf32>, vector<128x512xf32>, vector<8x512xf32> -> vector<8x512xf32>
    %95 = arith.addf %93, %94 : vector<8x512xf32>
    %96 = vector.extract_strided_slice %95 {offsets = [0, 0], sizes = [8, 128], strides = [1, 1]} : vector<8x512xf32> to vector<8x128xf32>
    %97 = arith.negf %96 : vector<8x128xf32>
    %98 = math.exp %97 : vector<8x128xf32>
    %cst_22 = arith.constant 1.000000e+00 : f32
    %99 = vector.broadcast %cst_22 : f32 to vector<8x128xf32>
    %100 = arith.addf %99, %98 : vector<8x128xf32>
    %101 = arith.divf %99, %100 : vector<8x128xf32>
    %102 = vector.extract_strided_slice %95 {offsets = [0, 128], sizes = [8, 128], strides = [1, 1]} : vector<8x512xf32> to vector<8x128xf32>
    %103 = arith.negf %102 : vector<8x128xf32>
    %104 = math.exp %103 : vector<8x128xf32>
    %cst_23 = arith.constant 1.000000e+00 : f32
    %105 = vector.broadcast %cst_23 : f32 to vector<8x128xf32>
    %106 = arith.addf %105, %104 : vector<8x128xf32>
    %107 = arith.divf %105, %106 : vector<8x128xf32>
    %108 = vector.extract_strided_slice %95 {offsets = [0, 256], sizes = [8, 128], strides = [1, 1]} : vector<8x512xf32> to vector<8x128xf32>
    %109 = math.tanh %108 : vector<8x128xf32>
    %110 = vector.extract_strided_slice %95 {offsets = [0, 384], sizes = [8, 128], strides = [1, 1]} : vector<8x512xf32> to vector<8x128xf32>
    %111 = arith.negf %110 : vector<8x128xf32>
    %112 = math.exp %111 : vector<8x128xf32>
    %cst_24 = arith.constant 1.000000e+00 : f32
    %113 = vector.broadcast %cst_24 : f32 to vector<8x128xf32>
    %114 = arith.addf %113, %112 : vector<8x128xf32>
    %115 = arith.divf %113, %114 : vector<8x128xf32>
    %116 = arith.mulf %107, %90 : vector<8x128xf32>
    %117 = arith.mulf %101, %109 : vector<8x128xf32>
    %118 = arith.addf %116, %117 : vector<8x128xf32>
    %119 = math.tanh %118 : vector<8x128xf32>
    %120 = arith.mulf %115, %119 : vector<8x128xf32>
    %121 = vector.extract_strided_slice %5 {offsets = [32, 0], sizes = [8, 512], strides = [1, 1]} : vector<64x512xf32> to vector<8x512xf32>
    %cst_25 = arith.constant dense<0.000000e+00> : vector<8x512xf32>
    %122 = tpu.matmul %120, %6, %cst_25 {dimension_numbers = #tpu.dot_dimension_numbers<[1], [0], [0], [1], [0, 0, 1, 1], [], []>} : vector<8x128xf32>, vector<128x512xf32>, vector<8x512xf32> -> vector<8x512xf32>
    %123 = arith.addf %121, %122 : vector<8x512xf32>
    %124 = vector.extract_strided_slice %123 {offsets = [0, 0], sizes = [8, 128], strides = [1, 1]} : vector<8x512xf32> to vector<8x128xf32>
    %125 = arith.negf %124 : vector<8x128xf32>
    %126 = math.exp %125 : vector<8x128xf32>
    %cst_26 = arith.constant 1.000000e+00 : f32
    %127 = vector.broadcast %cst_26 : f32 to vector<8x128xf32>
    %128 = arith.addf %127, %126 : vector<8x128xf32>
    %129 = arith.divf %127, %128 : vector<8x128xf32>
    %130 = vector.extract_strided_slice %123 {offsets = [0, 128], sizes = [8, 128], strides = [1, 1]} : vector<8x512xf32> to vector<8x128xf32>
    %131 = arith.negf %130 : vector<8x128xf32>
    %132 = math.exp %131 : vector<8x128xf32>
    %cst_27 = arith.constant 1.000000e+00 : f32
    %133 = vector.broadcast %cst_27 : f32 to vector<8x128xf32>
    %134 = arith.addf %133, %132 : vector<8x128xf32>
    %135 = arith.divf %133, %134 : vector<8x128xf32>
    %136 = vector.extract_strided_slice %123 {offsets = [0, 256], sizes = [8, 128], strides = [1, 1]} : vector<8x512xf32> to vector<8x128xf32>
    %137 = math.tanh %136 : vector<8x128xf32>
    %138 = vector.extract_strided_slice %123 {offsets = [0, 384], sizes = [8, 128], strides = [1, 1]} : vector<8x512xf32> to vector<8x128xf32>
    %139 = arith.negf %138 : vector<8x128xf32>
    %140 = math.exp %139 : vector<8x128xf32>
    %cst_28 = arith.constant 1.000000e+00 : f32
    %141 = vector.broadcast %cst_28 : f32 to vector<8x128xf32>
    %142 = arith.addf %141, %140 : vector<8x128xf32>
    %143 = arith.divf %141, %142 : vector<8x128xf32>
    %144 = arith.mulf %135, %118 : vector<8x128xf32>
    %145 = arith.mulf %129, %137 : vector<8x128xf32>
    %146 = arith.addf %144, %145 : vector<8x128xf32>
    %147 = math.tanh %146 : vector<8x128xf32>
    %148 = arith.mulf %143, %147 : vector<8x128xf32>
    %149 = vector.extract_strided_slice %5 {offsets = [40, 0], sizes = [8, 512], strides = [1, 1]} : vector<64x512xf32> to vector<8x512xf32>
    %cst_29 = arith.constant dense<0.000000e+00> : vector<8x512xf32>
    %150 = tpu.matmul %148, %6, %cst_29 {dimension_numbers = #tpu.dot_dimension_numbers<[1], [0], [0], [1], [0, 0, 1, 1], [], []>} : vector<8x128xf32>, vector<128x512xf32>, vector<8x512xf32> -> vector<8x512xf32>
    %151 = arith.addf %149, %150 : vector<8x512xf32>
    %152 = vector.extract_strided_slice %151 {offsets = [0, 0], sizes = [8, 128], strides = [1, 1]} : vector<8x512xf32> to vector<8x128xf32>
    %153 = arith.negf %152 : vector<8x128xf32>
    %154 = math.exp %153 : vector<8x128xf32>
    %cst_30 = arith.constant 1.000000e+00 : f32
    %155 = vector.broadcast %cst_30 : f32 to vector<8x128xf32>
    %156 = arith.addf %155, %154 : vector<8x128xf32>
    %157 = arith.divf %155, %156 : vector<8x128xf32>
    %158 = vector.extract_strided_slice %151 {offsets = [0, 128], sizes = [8, 128], strides = [1, 1]} : vector<8x512xf32> to vector<8x128xf32>
    %159 = arith.negf %158 : vector<8x128xf32>
    %160 = math.exp %159 : vector<8x128xf32>
    %cst_31 = arith.constant 1.000000e+00 : f32
    %161 = vector.broadcast %cst_31 : f32 to vector<8x128xf32>
    %162 = arith.addf %161, %160 : vector<8x128xf32>
    %163 = arith.divf %161, %162 : vector<8x128xf32>
    %164 = vector.extract_strided_slice %151 {offsets = [0, 256], sizes = [8, 128], strides = [1, 1]} : vector<8x512xf32> to vector<8x128xf32>
    %165 = math.tanh %164 : vector<8x128xf32>
    %166 = vector.extract_strided_slice %151 {offsets = [0, 384], sizes = [8, 128], strides = [1, 1]} : vector<8x512xf32> to vector<8x128xf32>
    %167 = arith.negf %166 : vector<8x128xf32>
    %168 = math.exp %167 : vector<8x128xf32>
    %cst_32 = arith.constant 1.000000e+00 : f32
    %169 = vector.broadcast %cst_32 : f32 to vector<8x128xf32>
    %170 = arith.addf %169, %168 : vector<8x128xf32>
    %171 = arith.divf %169, %170 : vector<8x128xf32>
    %172 = arith.mulf %163, %146 : vector<8x128xf32>
    %173 = arith.mulf %157, %165 : vector<8x128xf32>
    %174 = arith.addf %172, %173 : vector<8x128xf32>
    %175 = math.tanh %174 : vector<8x128xf32>
    %176 = arith.mulf %171, %175 : vector<8x128xf32>
    %177 = vector.extract_strided_slice %5 {offsets = [48, 0], sizes = [8, 512], strides = [1, 1]} : vector<64x512xf32> to vector<8x512xf32>
    %cst_33 = arith.constant dense<0.000000e+00> : vector<8x512xf32>
    %178 = tpu.matmul %176, %6, %cst_33 {dimension_numbers = #tpu.dot_dimension_numbers<[1], [0], [0], [1], [0, 0, 1, 1], [], []>} : vector<8x128xf32>, vector<128x512xf32>, vector<8x512xf32> -> vector<8x512xf32>
    %179 = arith.addf %177, %178 : vector<8x512xf32>
    %180 = vector.extract_strided_slice %179 {offsets = [0, 0], sizes = [8, 128], strides = [1, 1]} : vector<8x512xf32> to vector<8x128xf32>
    %181 = arith.negf %180 : vector<8x128xf32>
    %182 = math.exp %181 : vector<8x128xf32>
    %cst_34 = arith.constant 1.000000e+00 : f32
    %183 = vector.broadcast %cst_34 : f32 to vector<8x128xf32>
    %184 = arith.addf %183, %182 : vector<8x128xf32>
    %185 = arith.divf %183, %184 : vector<8x128xf32>
    %186 = vector.extract_strided_slice %179 {offsets = [0, 128], sizes = [8, 128], strides = [1, 1]} : vector<8x512xf32> to vector<8x128xf32>
    %187 = arith.negf %186 : vector<8x128xf32>
    %188 = math.exp %187 : vector<8x128xf32>
    %cst_35 = arith.constant 1.000000e+00 : f32
    %189 = vector.broadcast %cst_35 : f32 to vector<8x128xf32>
    %190 = arith.addf %189, %188 : vector<8x128xf32>
    %191 = arith.divf %189, %190 : vector<8x128xf32>
    %192 = vector.extract_strided_slice %179 {offsets = [0, 256], sizes = [8, 128], strides = [1, 1]} : vector<8x512xf32> to vector<8x128xf32>
    %193 = math.tanh %192 : vector<8x128xf32>
    %194 = vector.extract_strided_slice %179 {offsets = [0, 384], sizes = [8, 128], strides = [1, 1]} : vector<8x512xf32> to vector<8x128xf32>
    %195 = arith.negf %194 : vector<8x128xf32>
    %196 = math.exp %195 : vector<8x128xf32>
    %cst_36 = arith.constant 1.000000e+00 : f32
    %197 = vector.broadcast %cst_36 : f32 to vector<8x128xf32>
    %198 = arith.addf %197, %196 : vector<8x128xf32>
    %199 = arith.divf %197, %198 : vector<8x128xf32>
    %200 = arith.mulf %191, %174 : vector<8x128xf32>
    %201 = arith.mulf %185, %193 : vector<8x128xf32>
    %202 = arith.addf %200, %201 : vector<8x128xf32>
    %203 = math.tanh %202 : vector<8x128xf32>
    %204 = arith.mulf %199, %203 : vector<8x128xf32>
    %205 = vector.extract_strided_slice %5 {offsets = [56, 0], sizes = [8, 512], strides = [1, 1]} : vector<64x512xf32> to vector<8x512xf32>
    %cst_37 = arith.constant dense<0.000000e+00> : vector<8x512xf32>
    %206 = tpu.matmul %204, %6, %cst_37 {dimension_numbers = #tpu.dot_dimension_numbers<[1], [0], [0], [1], [0, 0, 1, 1], [], []>} : vector<8x128xf32>, vector<128x512xf32>, vector<8x512xf32> -> vector<8x512xf32>
    %207 = arith.addf %205, %206 : vector<8x512xf32>
    %208 = vector.extract_strided_slice %207 {offsets = [0, 0], sizes = [8, 128], strides = [1, 1]} : vector<8x512xf32> to vector<8x128xf32>
    %209 = arith.negf %208 : vector<8x128xf32>
    %210 = math.exp %209 : vector<8x128xf32>
    %cst_38 = arith.constant 1.000000e+00 : f32
    %211 = vector.broadcast %cst_38 : f32 to vector<8x128xf32>
    %212 = arith.addf %211, %210 : vector<8x128xf32>
    %213 = arith.divf %211, %212 : vector<8x128xf32>
    %214 = vector.extract_strided_slice %207 {offsets = [0, 128], sizes = [8, 128], strides = [1, 1]} : vector<8x512xf32> to vector<8x128xf32>
    %215 = arith.negf %214 : vector<8x128xf32>
    %216 = math.exp %215 : vector<8x128xf32>
    %cst_39 = arith.constant 1.000000e+00 : f32
    %217 = vector.broadcast %cst_39 : f32 to vector<8x128xf32>
    %218 = arith.addf %217, %216 : vector<8x128xf32>
    %219 = arith.divf %217, %218 : vector<8x128xf32>
    %220 = vector.extract_strided_slice %207 {offsets = [0, 256], sizes = [8, 128], strides = [1, 1]} : vector<8x512xf32> to vector<8x128xf32>
    %221 = math.tanh %220 : vector<8x128xf32>
    %222 = vector.extract_strided_slice %207 {offsets = [0, 384], sizes = [8, 128], strides = [1, 1]} : vector<8x512xf32> to vector<8x128xf32>
    %223 = arith.negf %222 : vector<8x128xf32>
    %224 = math.exp %223 : vector<8x128xf32>
    %cst_40 = arith.constant 1.000000e+00 : f32
    %225 = vector.broadcast %cst_40 : f32 to vector<8x128xf32>
    %226 = arith.addf %225, %224 : vector<8x128xf32>
    %227 = arith.divf %225, %226 : vector<8x128xf32>
    %228 = arith.mulf %219, %202 : vector<8x128xf32>
    %229 = arith.mulf %213, %221 : vector<8x128xf32>
    %230 = arith.addf %228, %229 : vector<8x128xf32>
    %231 = math.tanh %230 : vector<8x128xf32>
    %232 = arith.mulf %227, %231 : vector<8x128xf32>
    %cst_41 = arith.constant 0.000000e+00 : f32
    %233 = vector.broadcast %cst_41 : f32 to vector<8x128xf32>
    %234 = arith.maximumf %232, %233 : vector<8x128xf32>
    %c0_42 = arith.constant 0 : index
    %c0_43 = arith.constant 0 : index
    %235 = vector.load %arg4[%c0_42, %c0_43] : memref<128x128xf32, #tpu.memory_space<vmem>>, vector<128x128xf32>
    %cst_44 = arith.constant dense<0.000000e+00> : vector<8x128xf32>
    %236 = tpu.matmul %234, %235, %cst_44 {dimension_numbers = #tpu.dot_dimension_numbers<[1], [0], [0], [1], [0, 0, 1, 1], [], []>} : vector<8x128xf32>, vector<128x128xf32>, vector<8x128xf32> -> vector<8x128xf32>
    %c0_45 = arith.constant 0 : index
    %c0_46 = arith.constant 0 : index
    %237 = vector.load %arg5[%c0_45, %c0_46] : memref<1x128xf32, #tpu.memory_space<vmem>>, vector<1x128xf32>
    %238 = vector.broadcast %237 : vector<1x128xf32> to vector<8x128xf32>
    %239 = arith.addf %236, %238 : vector<8x128xf32>
    %cst_47 = arith.constant dense<0xFF800000> : vector<8xf32>
    %240 = vector.multi_reduction <maximumf>, %239, %cst_47 [1] : vector<8x128xf32> to vector<8xf32>
    %241 = vector.shape_cast %240 : vector<8xf32> to vector<8x1xf32>
    %242 = vector.broadcast %241 : vector<8x1xf32> to vector<8x128xf32>
    %243 = arith.subf %239, %242 : vector<8x128xf32>
    %244 = math.exp %243 : vector<8x128xf32>
    %cst_48 = arith.constant dense<0.000000e+00> : vector<8xf32>
    %245 = vector.multi_reduction <add>, %244, %cst_48 [1] : vector<8x128xf32> to vector<8xf32>
    %246 = vector.shape_cast %245 : vector<8xf32> to vector<8x1xf32>
    %247 = tpu.reciprocal %246 : vector<8x1xf32> -> vector<8x1xf32>
    %248 = vector.broadcast %247 : vector<8x1xf32> to vector<8x128xf32>
    %249 = arith.mulf %244, %248 : vector<8x128xf32>
    %c0_49 = arith.constant 0 : index
    %c0_50 = arith.constant 0 : index
    %250 = vector.load %arg6[%c0_49, %c0_50] : memref<8x128xf32, #tpu.memory_space<vmem>>, vector<8x128xf32>
    tpu.vector_store %arg6[%c0_49, %c0_50], %249 {strides = array<i32>} : memref<8x128xf32, #tpu.memory_space<vmem>>, vector<8x128xf32>,
    return
  }
}

</mosaic_0001>

<llo_original>
// kernel: tpu_custom_call.1
$region0: #{tpu_custom_call.1}
  #allocation0 [shape = 'u32[]', space=smem, size = 0x4, offset = 0x4, fixed_abs, tag = 'smem constant byte address 0x4 - core index']
  #allocation1 [shape = 'u32[144,128]{1,0:T(1,128)}', space=vmem, size = 0x12000, scoped, tag = 'internal scratch']
  %s0 = inlined_call_operand.vmem [shape: f32[64,32], index: 0, kind: input, shape index: {}]
  %s1 = inlined_call_operand.hbm [shape: f32[32,512], index: 1, kind: input, shape index: {}]
  %s2 = inlined_call_operand.hbm [shape: f32[128,512], index: 2, kind: input, shape index: {}]
  %s3 = inlined_call_operand.vmem [shape: f32[1,512], index: 3, kind: input, shape index: {}]
  %s4 = inlined_call_operand.hbm [shape: f32[128,128], index: 4, kind: input, shape index: {}]
  %s5 = inlined_call_operand.vmem [shape: f32[1,128], index: 5, kind: input, shape index: {}]
  %s6 = inlined_call_operand.hbm [shape: f32[8,128], index: 6, kind: output, shape index: {}]
  %s7 = sld [smem:[#allocation0]]
  $region46: #{tpu_custom_call.1} parent=0
    _
  %s9 = ssub.s32 1, %s7
  %s10 = scalar_select 0, %s9, %s7
  $region1: #{tpu_custom_call.1} parent=0
    #allocation2 [shape = 'u8[65536]{0}', space=vmem, size = 0x10000, scoped, tag = 'input window, operand 1, single buffered']
    #allocation3 [shape = 's32[1]{0}', space=sflag, size = 0x4, scoped, tag = 'scoped memory for tpu_custom_call.1']
    #allocation4 [shape = 's32[1]{0}', space=sflag, size = 0x4, scoped, tag = 'scoped memory for tpu_custom_call.1']
    #allocation5 [shape = 'u8[262144]{0}', space=vmem, size = 0x40000, scoped, tag = 'input window, operand 2, single buffered']
    #allocation6 [shape = 's32[1]{0}', space=sflag, size = 0x4, scoped, tag = 'scoped memory for tpu_custom_call.1']
    #allocation7 [shape = 'u8[65536]{0}', space=vmem, size = 0x10000, scoped, tag = 'input window, operand 4, single buffered']
    #allocation8 [shape = 'u8[4096]{0}', space=vmem, size = 0x1000, scoped, tag = 'output window, operand 0, single buffered']
    %11 = vsyncpa [#allocation3], 0
    %12 = vsyncpa [#allocation6], 0
    %13 = vsyncpa [#allocation4], 0
    // Predicated region
    $region2: #{tpu_custom_call.1} parent=1 // pred_check
      _
    $region3: #{tpu_custom_call.1} parent=1 // pred_check_branch
      %15 = sbr.rel (0) target = $region5
    $region4: #{tpu_custom_call.1} parent=1 // pred_region
      _
    $region5: #{tpu_custom_call.1} parent=1 // pred_fallthru
      _
    // Predicated region
    $region6: #{tpu_custom_call.1} parent=1 // pred_check
      _
    $region7: #{tpu_custom_call.1} parent=1 // pred_check_branch
      %17 = sbr.rel (0) target = $region9
    $region8: #{tpu_custom_call.1} parent=1 // pred_region
      %s19 = ssub.s32 2048, 2048
      %20 = vsyncadd [#allocation3], %s19
      %s21 = sshll.u32 [#allocation2], 4
      %s22 = int_to_ptr.vmem [resolvable:$true] %s21
      %27 = dma.hbm_to_vmem [thread:$0]  %s1, 2048, %s22, [#allocation3], 512, 512, 32
    $region9: #{tpu_custom_call.1} parent=1 // pred_fallthru
      _
    // Predicated region
    $region10: #{tpu_custom_call.1} parent=1 // pred_check
      _
    $region11: #{tpu_custom_call.1} parent=1 // pred_check_branch
      %29 = sbr.rel (0) target = $region13
    $region12: #{tpu_custom_call.1} parent=1 // pred_region
      %s31 = ssub.s32 8192, 8192
      %32 = vsyncadd [#allocation6], %s31
      %s33 = sshll.u32 [#allocation5], 4
      %s34 = int_to_ptr.vmem [resolvable:$true] %s33
      %39 = dma.hbm_to_vmem [thread:$0]  %s2, 8192, %s34, [#allocation6], 512, 512, 32
    $region13: #{tpu_custom_call.1} parent=1 // pred_fallthru
      _
    // Predicated region
    $region14: #{tpu_custom_call.1} parent=1 // pred_check
      _
    $region15: #{tpu_custom_call.1} parent=1 // pred_check_branch
      %41 = sbr.rel (0) target = $region17
    $region16: #{tpu_custom_call.1} parent=1 // pred_region
      _
    $region17: #{tpu_custom_call.1} parent=1 // pred_fallthru
      _
    // Predicated region
    $region18: #{tpu_custom_call.1} parent=1 // pred_check
      _
    $region19: #{tpu_custom_call.1} parent=1 // pred_check_branch
      %43 = sbr.rel (0) target = $region21
    $region20: #{tpu_custom_call.1} parent=1 // pred_region
      %s45 = ssub.s32 2048, 2048
      %46 = vsyncadd [#allocation6], %s45
      %s47 = sshll.u32 [#allocation7], 4
      %s48 = int_to_ptr.vmem [resolvable:$true] %s47
      %53 = dma.hbm_to_vmem [thread:$0]  %s4, 2048, %s48, [#allocation6], 128, 128, 8
    $region21: #{tpu_custom_call.1} parent=1 // pred_fallthru
      _
    // Predicated region
    $region22: #{tpu_custom_call.1} parent=1 // pred_check
      _
    $region23: #{tpu_custom_call.1} parent=1 // pred_check_branch
      %55 = sbr.rel (0) target = $region25
    $region24: #{tpu_custom_call.1} parent=1 // pred_region
      _
    $region25: #{tpu_custom_call.1} parent=1 // pred_fallthru
      _
    // Predicated region
    $region26: #{tpu_custom_call.1} parent=1 // pred_check
      _
    $region27: #{tpu_custom_call.1} parent=1 // pred_check_branch
      %57 = sbr.rel (0) target = $region29
    $region28: #{tpu_custom_call.1} parent=1 // pred_region
      %58 = dma.done [#allocation3], 2048
    $region29: #{tpu_custom_call.1} parent=1 // pred_fallthru
      _
    // Predicated region
    $region30: #{tpu_custom_call.1} parent=1 // pred_check
      _
    $region31: #{tpu_custom_call.1} parent=1 // pred_check_branch
      %60 = sbr.rel (0) target = $region33
    $region32: #{tpu_custom_call.1} parent=1 // pred_region
      %61 = dma.done [#allocation6], 8192
    $region33: #{tpu_custom_call.1} parent=1 // pred_fallthru
      _
    // Predicated region
    $region34: #{tpu_custom_call.1} parent=1 // pred_check
      _
    $region35: #{tpu_custom_call.1} parent=1 // pred_check_branch
      %63 = sbr.rel (0) target = $region37
    $region36: #{tpu_custom_call.1} parent=1 // pred_region
      %64 = dma.done [#allocation6], 2048
    $region37: #{tpu_custom_call.1} parent=1 // pred_fallthru
      _
    %v65 = vld [vmem:[%s0] sm:$0xff]
    %v66 = vld [vmem:[%s0 + $0x8] sm:$0xff]
    %v67 = vld [vmem:[%s0 + $0x10] sm:$0xff]
    %v68 = vld [vmem:[%s0 + $0x18] sm:$0xff]
    %v69 = vld [vmem:[%s0 + $0x20] sm:$0xff]
    %v70 = vld [vmem:[%s0 + $0x28] sm:$0xff]
    %v71 = vld [vmem:[%s0 + $0x30] sm:$0xff]
    %v72 = vld [vmem:[%s0 + $0x38] sm:$0xff]
    %v73 = vld [vmem:[#allocation2] sm:$0xff]
    %v74 = vld [vmem:[#allocation2 + $0x8] sm:$0xff]
    %v75 = vld [vmem:[#allocation2 + $0x10] sm:$0xff]
    %v76 = vld [vmem:[#allocation2 + $0x18] sm:$0xff]
    %v77 = vld [vmem:[#allocation2 + $0x20] sm:$0xff]
    %v78 = vld [vmem:[#allocation2 + $0x28] sm:$0xff]
    %v79 = vld [vmem:[#allocation2 + $0x30] sm:$0xff]
    %v80 = vld [vmem:[#allocation2 + $0x38] sm:$0xff]
    %v81 = vld [vmem:[#allocation2 + $0x40] sm:$0xff]
    %v82 = vld [vmem:[#allocation2 + $0x48] sm:$0xff]
    %v83 = vld [vmem:[#allocation2 + $0x50] sm:$0xff]
    %v84 = vld [vmem:[#allocation2 + $0x58] sm:$0xff]
    %v85 = vld [vmem:[#allocation2 + $0x60] sm:$0xff]
    %v86 = vld [vmem:[#allocation2 + $0x68] sm:$0xff]
    %v87 = vld [vmem:[#allocation2 + $0x70] sm:$0xff]
    %v88 = vld [vmem:[#allocation2 + $0x78] sm:$0xff]
    %v89 = vld [vmem:[%s3] sm:$0xf]
    %v91 = vlaneseq
    %v92 = vshrl.u32 %v91, 7
    %v93 = vsub.s32 0, %v92
    %v94 = vrot.slane %v89, %v93
    %v95 = vlaneseq
    %v96 = vshrl.u32 %v95, 7
    %v97 = vsub.s32 1, %v96
    %v98 = vrot.slane %v89, %v97
    %v99 = vlaneseq
    %v100 = vshrl.u32 %v99, 7
    %v101 = vsub.s32 2, %v100
    %v102 = vrot.slane %v89, %v101
    %v103 = vlaneseq
    %v104 = vshrl.u32 %v103, 7
    %v105 = vsub.s32 3, %v104
    %v106 = vrot.slane %v89, %v105
    %vm111 = vcmask 261120
    %v113 = vsel %vm111, %v65, 0
    %v116 = vsel %vm111, %v66, 0
    %v119 = vsel %vm111, %v67, 0
    %v122 = vsel %vm111, %v68, 0
    %v125 = vsel %vm111, %v69, 0
    %v128 = vsel %vm111, %v70, 0
    %v131 = vsel %vm111, %v71, 0
    %v134 = vsel %vm111, %v72, 0
    %136 = vmatprep.subr.mxu0 %v74
    %137 = vmatpush1.msra.mxu0 %v73
    %138 = vmatprep.subr.mxu0 %v78
    %139 = vmatpush1.msra.mxu0 %v77
    %140 = vmatprep.subr.mxu0 %v82
    %141 = vmatpush1.msra.mxu0 %v81
    %142 = vmatprep.subr.mxu0 %v86
    %143 = vmatpush1.msra.mxu0 %v85
    %144 = vmatprep.subr.mxu0 0.0
    %145 = vmatpush1.msra.mxu0 0.0
    %146 = vmatprep.subr.mxu0 0.0
    %147 = vmatpush1.msra.mxu0 0.0
    %148 = vmatprep.subr.mxu0 0.0
    %149 = vmatpush1.msra.mxu0 0.0
    %150 = vmatprep.subr.mxu0 0.0
    %151 = vmatpush1.msra.mxu0 0.0
    %152 = vmatprep.subr.mxu0 0.0
    %153 = vmatpush1.msra.mxu0 0.0
    %154 = vmatprep.subr.mxu0 0.0
    %155 = vmatpush1.msra.mxu0 0.0
    %156 = vmatprep.subr.mxu0 0.0
    %157 = vmatpush1.msra.mxu0 0.0
    %158 = vmatprep.subr.mxu0 0.0
    %159 = vmatpush1.msra.mxu0 0.0
    %160 = vmatprep.subr.mxu0 0.0
    %161 = vmatpush1.msra.mxu0 0.0
    %162 = vmatprep.subr.mxu0 0.0
    %163 = vmatpush1.msra.mxu0 0.0
    %164 = vmatprep.subr.mxu0 0.0
    %165 = vmatpush1.msra.mxu0 0.0
    %166 = vmatprep.subr.mxu0 0.0
    %167 = vmatpush1.msra.mxu0 0.0
    %168 = vmatprep.subr.mxu0 0.0
    %169 = vmatpush1.msra.mxu0 0.0
    %170 = vmatprep.subr.mxu0 0.0
    %171 = vmatpush1.msra.mxu0 0.0
    %172 = vmatprep.subr.mxu0 0.0
    %173 = vmatpush1.msra.mxu0 0.0
    %174 = vmatprep.subr.mxu0 0.0
    %175 = vmatpush1.msra.mxu0 0.0
    %176 = vmatprep.subr.mxu0 0.0
    %177 = vmatpush1.msra.mxu0 0.0
    %178 = vmatprep.subr.mxu0 0.0
    %179 = vmatpush1.msra.mxu0 0.0
    %180 = vmatprep.subr.mxu0 0.0
    %181 = vmatpush1.msra.mxu0 0.0
    %182 = vmatprep.subr.mxu0 0.0
    %183 = vmatpush1.msra.mxu0 0.0
    %184 = vmatprep.subr.mxu0 0.0
    %185 = vmatpush1.msra.mxu0 0.0
    %186 = vmatprep.subr.mxu0 0.0
    %187 = vmatpush1.msra.mxu0 0.0
    %188 = vmatprep.subr.mxu0 0.0
    %189 = vmatpush1.msra.mxu0 0.0
    %190 = vmatprep.subr.mxu0 0.0
    %191 = vmatpush1.msra.mxu0 0.0
    %192 = vmatprep.subr.mxu0 0.0
    %193 = vmatpush1.msra.mxu0 0.0
    %194 = vmatprep.subr.mxu0 0.0
    %195 = vmatpush1.msra.mxu0 0.0
    %196 = vmatprep.subr.mxu0 0.0
    %197 = vmatpush1.msra.mxu0 0.0
    %198 = vmatprep.subr.mxu0 0.0
    %199 = vmatpush1.msra.mxu0 0.0
    %200 = vmatprep.mubr.f32.mxu0 0.0
    %201 = vmatmul.mubr.f32.gmra.mrb[0].mxu0 %v113
    %v202 = vpop.f32.mrb[0].mxu0
    %v203 = vadd.f32 %v94, %v202
    %v204 = vpop.f32.mrb[0].mxu0
    %v205 = vadd.f32 %v98, %v204
    %206 = vmatprep.mubr.f32.mxu0 0.0
    %207 = vmatmul.mubr.f32.gmra.mrb[0].mxu0 %v116
    %v208 = vpop.f32.mrb[0].mxu0
    %v209 = vadd.f32 %v94, %v208
    %v210 = vpop.f32.mrb[0].mxu0
    %v211 = vadd.f32 %v98, %v210
    %212 = vmatprep.mubr.f32.mxu0 0.0
    %213 = vmatmul.mubr.f32.gmra.mrb[0].mxu0 %v119
    %v214 = vpop.f32.mrb[0].mxu0
    %v215 = vadd.f32 %v94, %v214
    %v216 = vpop.f32.mrb[0].mxu0
    %v217 = vadd.f32 %v98, %v216
    %218 = vmatprep.mubr.f32.mxu0 0.0
    %219 = vmatmul.mubr.f32.gmra.mrb[0].mxu0 %v122
    %v220 = vpop.f32.mrb[0].mxu0
    %v221 = vadd.f32 %v94, %v220
    %v222 = vpop.f32.mrb[0].mxu0
    %v223 = vadd.f32 %v98, %v222
    %224 = vmatprep.mubr.f32.mxu0 0.0
    %225 = vmatmul.mubr.f32.gmra.mrb[0].mxu0 %v125
    %v226 = vpop.f32.mrb[0].mxu0
    %v227 = vadd.f32 %v94, %v226
    %v228 = vpop.f32.mrb[0].mxu0
    %v229 = vadd.f32 %v98, %v228
    %230 = vmatprep.mubr.f32.mxu0 0.0
    %231 = vmatmul.mubr.f32.gmra.mrb[0].mxu0 %v128
    %v232 = vpop.f32.mrb[0].mxu0
    %v233 = vadd.f32 %v94, %v232
    %v234 = vpop.f32.mrb[0].mxu0
    %v235 = vadd.f32 %v98, %v234
    %236 = vmatprep.mubr.f32.mxu0 0.0
    %237 = vmatmul.mubr.f32.gmra.mrb[0].mxu0 %v131
    %v238 = vpop.f32.mrb[0].mxu0
    %v239 = vadd.f32 %v94, %v238
    %v240 = vpop.f32.mrb[0].mxu0
    %v241 = vadd.f32 %v98, %v240
    %242 = vmatprep.mubr.f32.mxu0 0.0
    %243 = vmatmul.mubr.f32.gmra.mrb[0].mxu0 %v134
    %v244 = vpop.f32.mrb[0].mxu0
    %v245 = vadd.f32 %v94, %v244
    %v246 = vpop.f32.mrb[0].mxu0
    %v247 = vadd.f32 %v98, %v246
    %248 = vdwg.mxu0
    %249 = vmatprep.subr.mxu0 %v76
    %250 = vmatpush1.msra.mxu0 %v75
    %251 = vmatprep.subr.mxu0 %v80
    %252 = vmatpush1.msra.mxu0 %v79
    %253 = vmatprep.subr.mxu0 %v84
    %254 = vmatpush1.msra.mxu0 %v83
    %255 = vmatprep.subr.mxu0 %v88
    %256 = vmatpush1.msra.mxu0 %v87
    %257 = vmatprep.subr.mxu0 0.0
    %258 = vmatpush1.msra.mxu0 0.0
    %259 = vmatprep.subr.mxu0 0.0
    %260 = vmatpush1.msra.mxu0 0.0
    %261 = vmatprep.subr.mxu0 0.0
    %262 = vmatpush1.msra.mxu0 0.0
    %263 = vmatprep.subr.mxu0 0.0
    %264 = vmatpush1.msra.mxu0 0.0
    %265 = vmatprep.subr.mxu0 0.0
    %266 = vmatpush1.msra.mxu0 0.0
    %267 = vmatprep.subr.mxu0 0.0
    %268 = vmatpush1.msra.mxu0 0.0
    %269 = vmatprep.subr.mxu0 0.0
    %270 = vmatpush1.msra.mxu0 0.0
    %271 = vmatprep.subr.mxu0 0.0
    %272 = vmatpush1.msra.mxu0 0.0
    %273 = vmatprep.subr.mxu0 0.0
    %274 = vmatpush1.msra.mxu0 0.0
    %275 = vmatprep.subr.mxu0 0.0
    %276 = vmatpush1.msra.mxu0 0.0
    %277 = vmatprep.subr.mxu0 0.0
    %278 = vmatpush1.msra.mxu0 0.0
    %279 = vmatprep.subr.mxu0 0.0
    %280 = vmatpush1.msra.mxu0 0.0
    %281 = vmatprep.subr.mxu0 0.0
    %282 = vmatpush1.msra.mxu0 0.0
    %283 = vmatprep.subr.mxu0 0.0
    %284 = vmatpush1.msra.mxu0 0.0
    %285 = vmatprep.subr.mxu0 0.0
    %286 = vmatpush1.msra.mxu0 0.0
    %287 = vmatprep.subr.mxu0 0.0
    %288 = vmatpush1.msra.mxu0 0.0
    %289 = vmatprep.subr.mxu0 0.0
    %290 = vmatpush1.msra.mxu0 0.0
    %291 = vmatprep.subr.mxu0 0.0
    %292 = vmatpush1.msra.mxu0 0.0
    %293 = vmatprep.subr.mxu0 0.0
    %294 = vmatpush1.msra.mxu0 0.0
    %295 = vmatprep.subr.mxu0 0.0
    %296 = vmatpush1.msra.mxu0 0.0
    %297 = vmatprep.subr.mxu0 0.0
    %298 = vmatpush1.msra.mxu0 0.0
    %299 = vmatprep.subr.mxu0 0.0
    %300 = vmatpush1.msra.mxu0 0.0
    %301 = vmatprep.subr.mxu0 0.0
    %302 = vmatpush1.msra.mxu0 0.0
    %303 = vmatprep.subr.mxu0 0.0
    %304 = vmatpush1.msra.mxu0 0.0
    %305 = vmatprep.subr.mxu0 0.0
    %306 = vmatpush1.msra.mxu0 0.0
    %307 = vmatprep.subr.mxu0 0.0
    %308 = vmatpush1.msra.mxu0 0.0
    %309 = vmatprep.subr.mxu0 0.0
    %310 = vmatpush1.msra.mxu0 0.0
    %311 = vmatprep.subr.mxu0 0.0
    %312 = vmatpush1.msra.mxu0 0.0
    %313 = vmatprep.mubr.f32.mxu0 0.0
    %314 = vmatmul.mubr.f32.gmra.mrb[0].mxu0 %v113
    %v315 = vpop.f32.mrb[0].mxu0
    %v316 = vadd.f32 %v102, %v315
    %v317 = vpop.f32.mrb[0].mxu0
    %v318 = vadd.f32 %v106, %v317
    %319 = vmatprep.mubr.f32.mxu0 0.0
    %320 = vmatmul.mubr.f32.gmra.mrb[0].mxu0 %v116
    %v321 = vpop.f32.mrb[0].mxu0
    %v322 = vadd.f32 %v102, %v321
    %v323 = vpop.f32.mrb[0].mxu0
    %v324 = vadd.f32 %v106, %v323
    %325 = vmatprep.mubr.f32.mxu0 0.0
    %326 = vmatmul.mubr.f32.gmra.mrb[0].mxu0 %v119
    %v327 = vpop.f32.mrb[0].mxu0
    %v328 = vadd.f32 %v102, %v327
    %v329 = vpop.f32.mrb[0].mxu0
    %v330 = vadd.f32 %v106, %v329
    %331 = vmatprep.mubr.f32.mxu0 0.0
    %332 = vmatmul.mubr.f32.gmra.mrb[0].mxu0 %v122
    %v333 = vpop.f32.mrb[0].mxu0
    %v334 = vadd.f32 %v102, %v333
    %v335 = vpop.f32.mrb[0].mxu0
    %v336 = vadd.f32 %v106, %v335
    %337 = vmatprep.mubr.f32.mxu0 0.0
    %338 = vmatmul.mubr.f32.gmra.mrb[0].mxu0 %v125
    %v339 = vpop.f32.mrb[0].mxu0
    %v340 = vadd.f32 %v102, %v339
    %v341 = vpop.f32.mrb[0].mxu0
    %v342 = vadd.f32 %v106, %v341
    %343 = vmatprep.mubr.f32.mxu0 0.0
    %344 = vmatmul.mubr.f32.gmra.mrb[0].mxu0 %v128
    %v345 = vpop.f32.mrb[0].mxu0
    %v346 = vadd.f32 %v102, %v345
    %v347 = vpop.f32.mrb[0].mxu0
    %v348 = vadd.f32 %v106, %v347
    %349 = vmatprep.mubr.f32.mxu0 0.0
    %350 = vmatmul.mubr.f32.gmra.mrb[0].mxu0 %v131
    %v351 = vpop.f32.mrb[0].mxu0
    %v352 = vadd.f32 %v102, %v351
    %v353 = vpop.f32.mrb[0].mxu0
    %v354 = vadd.f32 %v106, %v353
    %355 = vmatprep.mubr.f32.mxu0 0.0
    %356 = vmatmul.mubr.f32.gmra.mrb[0].mxu0 %v134
    %v357 = vpop.f32.mrb[0].mxu0
    %v358 = vadd.f32 %v102, %v357
    %v359 = vpop.f32.mrb[0].mxu0
    %v360 = vadd.f32 %v106, %v359
    %361 = vdwg.mxu0
    %v362 = vld [vmem:[#allocation5] sm:$0xff]
    %v363 = vld [vmem:[#allocation5 + $0x8] sm:$0xff]
    %v364 = vld [vmem:[#allocation5 + $0x10] sm:$0xff]
    %v365 = vld [vmem:[#allocation5 + $0x18] sm:$0xff]
    %v366 = vld [vmem:[#allocation5 + $0x20] sm:$0xff]
    %v367 = vld [vmem:[#allocation5 + $0x28] sm:$0xff]
    %v368 = vld [vmem:[#allocation5 + $0x30] sm:$0xff]
    %v369 = vld [vmem:[#allocation5 + $0x38] sm:$0xff]
    %v370 = vld [vmem:[#allocation5 + $0x40] sm:$0xff]
    %v371 = vld [vmem:[#allocation5 + $0x48] sm:$0xff]
    %v372 = vld [vmem:[#allocation5 + $0x50] sm:$0xff]
    %v373 = vld [vmem:[#allocation5 + $0x58] sm:$0xff]
    %v374 = vld [vmem:[#allocation5 + $0x60] sm:$0xff]
    %v375 = vld [vmem:[#allocation5 + $0x68] sm:$0xff]
    %v376 = vld [vmem:[#allocation5 + $0x70] sm:$0xff]
    %v377 = vld [vmem:[#allocation5 + $0x78] sm:$0xff]
    %v378 = vld [vmem:[#allocation5 + $0x80] sm:$0xff]
    %v379 = vld [vmem:[#allocation5 + $0x88] sm:$0xff]
    %v380 = vld [vmem:[#allocation5 + $0x90] sm:$0xff]
    %v381 = vld [vmem:[#allocation5 + $0x98] sm:$0xff]
    %v382 = vld [vmem:[#allocation5 + $0xa0] sm:$0xff]
    %v383 = vld [vmem:[#allocation5 + $0xa8] sm:$0xff]
    %v384 = vld [vmem:[#allocation5 + $0xb0] sm:$0xff]
    %v385 = vld [vmem:[#allocation5 + $0xb8] sm:$0xff]
    %v386 = vld [vmem:[#allocation5 + $0xc0] sm:$0xff]
    %v387 = vld [vmem:[#allocation5 + $0xc8] sm:$0xff]
    %v388 = vld [vmem:[#allocation5 + $0xd0] sm:$0xff]
    %v389 = vld [vmem:[#allocation5 + $0xd8] sm:$0xff]
    %v390 = vld [vmem:[#allocation5 + $0xe0] sm:$0xff]
    %v391 = vld [vmem:[#allocation5 + $0xe8] sm:$0xff]
    %v392 = vld [vmem:[#allocation5 + $0xf0] sm:$0xff]
    %v393 = vld [vmem:[#allocation5 + $0xf8] sm:$0xff]
    %v394 = vld [vmem:[#allocation5 + $0x100] sm:$0xff]
    %v395 = vld [vmem:[#allocation5 + $0x108] sm:$0xff]
    %v396 = vld [vmem:[#allocation5 + $0x110] sm:$0xff]
    %v397 = vld [vmem:[#allocation5 + $0x118] sm:$0xff]
    %v398 = vld [vmem:[#allocation5 + $0x120] sm:$0xff]
    %v399 = vld [vmem:[#allocation5 + $0x128] sm:$0xff]
    %v400 = vld [vmem:[#allocation5 + $0x130] sm:$0xff]
    %v401 = vld [vmem:[#allocation5 + $0x138] sm:$0xff]
    %v402 = vld [vmem:[#allocation5 + $0x140] sm:$0xff]
    %v403 = vld [vmem:[#allocation5 + $0x148] sm:$0xff]
    %v404 = vld [vmem:[#allocation5 + $0x150] sm:$0xff]
    %v405 = vld [vmem:[#allocation5 + $0x158] sm:$0xff]
    %v406 = vld [vmem:[#allocation5 + $0x160] sm:$0xff]
    %v407 = vld [vmem:[#allocation5 + $0x168] sm:$0xff]
    %v408 = vld [vmem:[#allocation5 + $0x170] sm:$0xff]
    %v409 = vld [vmem:[#allocation5 + $0x178] sm:$0xff]
    %v410 = vld [vmem:[#allocation5 + $0x180] sm:$0xff]
    %v411 = vld [vmem:[#allocation5 + $0x188] sm:$0xff]
    %v412 = vld [vmem:[#allocation5 + $0x190] sm:$0xff]
    %v413 = vld [vmem:[#allocation5 + $0x198] sm:$0xff]
    %v414 = vld [vmem:[#allocation5 + $0x1a0] sm:$0xff]
    %v415 = vld [vmem:[#allocation5 + $0x1a8] sm:$0xff]
    %v416 = vld [vmem:[#allocation5 + $0x1b0] sm:$0xff]
    %v417 = vld [vmem:[#allocation5 + $0x1b8] sm:$0xff]
    %v418 = vld [vmem:[#allocation5 + $0x1c0] sm:$0xff]
    %v419 = vld [vmem:[#allocation5 + $0x1c8] sm:$0xff]
    %v420 = vld [vmem:[#allocation5 + $0x1d0] sm:$0xff]
    %v421 = vld [vmem:[#allocation5 + $0x1d8] sm:$0xff]
    %v422 = vld [vmem:[#allocation5 + $0x1e0] sm:$0xff]
    %v423 = vld [vmem:[#allocation5 + $0x1e8] sm:$0xff]
    %v424 = vld [vmem:[#allocation5 + $0x1f0] sm:$0xff]
    %v425 = vld [vmem:[#allocation5 + $0x1f8] sm:$0xff]
    %426 = vmatprep.subr.mxu0 %v363
    %427 = vmatpush1.msra.mxu0 %v362
    %428 = vmatprep.subr.mxu0 %v367
    %429 = vmatpush1.msra.mxu0 %v366
    %430 = vmatprep.subr.mxu0 %v371
    %431 = vmatpush1.msra.mxu0 %v370
    %432 = vmatprep.subr.mxu0 %v375
    %433 = vmatpush1.msra.mxu0 %v374
    %434 = vmatprep.subr.mxu0 %v379
    %435 = vmatpush1.msra.mxu0 %v378
    %436 = vmatprep.subr.mxu0 %v383
    %437 = vmatpush1.msra.mxu0 %v382
    %438 = vmatprep.subr.mxu0 %v387
    %439 = vmatpush1.msra.mxu0 %v386
    %440 = vmatprep.subr.mxu0 %v391
    %441 = vmatpush1.msra.mxu0 %v390
    %442 = vmatprep.subr.mxu0 %v395
    %443 = vmatpush1.msra.mxu0 %v394
    %444 = vmatprep.subr.mxu0 %v399
    %445 = vmatpush1.msra.mxu0 %v398
    %446 = vmatprep.subr.mxu0 %v403
    %447 = vmatpush1.msra.mxu0 %v402
    %448 = vmatprep.subr.mxu0 %v407
    %449 = vmatpush1.msra.mxu0 %v406
    %450 = vmatprep.subr.mxu0 %v411
    %451 = vmatpush1.msra.mxu0 %v410
    %452 = vmatprep.subr.mxu0 %v415
    %453 = vmatpush1.msra.mxu0 %v414
    %454 = vmatprep.subr.mxu0 %v419
    %455 = vmatpush1.msra.mxu0 %v418
    %456 = vmatprep.subr.mxu0 %v423
    %457 = vmatpush1.msra.mxu0 %v422
    %458 = vmatprep.subr.mxu0 0.0
    %459 = vmatpush1.msra.mxu0 0.0
    %460 = vmatprep.subr.mxu0 0.0
    %461 = vmatpush1.msra.mxu0 0.0
    %462 = vmatprep.subr.mxu0 0.0
    %463 = vmatpush1.msra.mxu0 0.0
    %464 = vmatprep.subr.mxu0 0.0
    %465 = vmatpush1.msra.mxu0 0.0
    %466 = vmatprep.subr.mxu0 0.0
    %467 = vmatpush1.msra.mxu0 0.0
    %468 = vmatprep.subr.mxu0 0.0
    %469 = vmatpush1.msra.mxu0 0.0
    %470 = vmatprep.subr.mxu0 0.0
    %471 = vmatpush1.msra.mxu0 0.0
    %472 = vmatprep.subr.mxu0 0.0
    %473 = vmatpush1.msra.mxu0 0.0
    %474 = vmatprep.subr.mxu0 0.0
    %475 = vmatpush1.msra.mxu0 0.0
    %476 = vmatprep.subr.mxu0 0.0
    %477 = vmatpush1.msra.mxu0 0.0
    %478 = vmatprep.subr.mxu0 0.0
    %479 = vmatpush1.msra.mxu0 0.0
    %480 = vmatprep.subr.mxu0 0.0
    %481 = vmatpush1.msra.mxu0 0.0
    %482 = vmatprep.subr.mxu0 0.0
    %483 = vmatpush1.msra.mxu0 0.0
    %484 = vmatprep.subr.mxu0 0.0
    %485 = vmatpush1.msra.mxu0 0.0
    %486 = vmatprep.subr.mxu0 0.0
    %487 = vmatpush1.msra.mxu0 0.0
    %488 = vmatprep.subr.mxu0 0.0
    %489 = vmatpush1.msra.mxu0 0.0
    %490 = vmatprep.mubr.f32.mxu0 0.0
    %491 = vmatmul.mubr.f32.gmra.mrb[0].mxu0 0.0
    %v492 = vpop.f32.mrb[0].mxu0
    %v493 = vadd.f32 0.0, %v492
    %v494 = vpop.f32.mrb[0].mxu0
    %v495 = vadd.f32 0.0, %v494
    %496 = vdwg.mxu0
    %497 = vmatprep.subr.mxu0 %v365
    %498 = vmatpush1.msra.mxu0 %v364
    %499 = vmatprep.subr.mxu0 %v369
    %500 = vmatpush1.msra.mxu0 %v368
    %501 = vmatprep.subr.mxu0 %v373
    %502 = vmatpush1.msra.mxu0 %v372
    %503 = vmatprep.subr.mxu0 %v377
    %504 = vmatpush1.msra.mxu0 %v376
    %505 = vmatprep.subr.mxu0 %v381
    %506 = vmatpush1.msra.mxu0 %v380
    %507 = vmatprep.subr.mxu0 %v385
    %508 = vmatpush1.msra.mxu0 %v384
    %509 = vmatprep.subr.mxu0 %v389
    %510 = vmatpush1.msra.mxu0 %v388
    %511 = vmatprep.subr.mxu0 %v393
    %512 = vmatpush1.msra.mxu0 %v392
    %513 = vmatprep.subr.mxu0 %v397
    %514 = vmatpush1.msra.mxu0 %v396
    %515 = vmatprep.subr.mxu0 %v401
    %516 = vmatpush1.msra.mxu0 %v400
    %517 = vmatprep.subr.mxu0 %v405
    %518 = vmatpush1.msra.mxu0 %v404
    %519 = vmatprep.subr.mxu0 %v409
    %520 = vmatpush1.msra.mxu0 %v408
    %521 = vmatprep.subr.mxu0 %v413
    %522 = vmatpush1.msra.mxu0 %v412
    %523 = vmatprep.subr.mxu0 %v417
    %524 = vmatpush1.msra.mxu0 %v416
    %525 = vmatprep.subr.mxu0 %v421
    %526 = vmatpush1.msra.mxu0 %v420
    %527 = vmatprep.subr.mxu0 %v425
    %528 = vmatpush1.msra.mxu0 %v424
    %529 = vmatprep.subr.mxu0 0.0
    %530 = vmatpush1.msra.mxu0 0.0
    %531 = vmatprep.subr.mxu0 0.0
    %532 = vmatpush1.msra.mxu0 0.0
    %533 = vmatprep.subr.mxu0 0.0
    %534 = vmatpush1.msra.mxu0 0.0
    %535 = vmatprep.subr.mxu0 0.0
    %536 = vmatpush1.msra.mxu0 0.0
    %537 = vmatprep.subr.mxu0 0.0
    %538 = vmatpush1.msra.mxu0 0.0
    %539 = vmatprep.subr.mxu0 0.0
    %540 = vmatpush1.msra.mxu0 0.0
    %541 = vmatprep.subr.mxu0 0.0
    %542 = vmatpush1.msra.mxu0 0.0
    %543 = vmatprep.subr.mxu0 0.0
    %544 = vmatpush1.msra.mxu0 0.0
    %545 = vmatprep.subr.mxu0 0.0
    %546 = vmatpush1.msra.mxu0 0.0
    %547 = vmatprep.subr.mxu0 0.0
    %548 = vmatpush1.msra.mxu0 0.0
    %549 = vmatprep.subr.mxu0 0.0
    %550 = vmatpush1.msra.mxu0 0.0
    %551 = vmatprep.subr.mxu0 0.0
    %552 = vmatpush1.msra.mxu0 0.0
    %553 = vmatprep.subr.mxu0 0.0
    %554 = vmatpush1.msra.mxu0 0.0
    %555 = vmatprep.subr.mxu0 0.0
    %556 = vmatpush1.msra.mxu0 0.0
    %557 = vmatprep.subr.mxu0 0.0
    %558 = vmatpush1.msra.mxu0 0.0
    %559 = vmatprep.subr.mxu0 0.0
    %560 = vmatpush1.msra.mxu0 0.0
    %561 = vmatprep.mubr.f32.mxu0 0.0
    %562 = vmatmul.mubr.f32.gmra.mrb[0].mxu0 0.0
    %v563 = vpop.f32.mrb[0].mxu0
    %v564 = vadd.f32 0.0, %v563
    %v565 = vpop.f32.mrb[0].mxu0
    %v566 = vadd.f32 0.0, %v565
    %567 = vdwg.mxu0
    %v568 = vadd.f32 %v203, %v493
    %v569 = vadd.f32 %v205, %v495
    %v570 = vadd.f32 %v316, %v564
    %v571 = vadd.f32 %v318, %v566
    %v572 = vxor.u32 %v568, 2147483648
    %v573 = vmul.f32 %v572, 1.442695
    %v574 = vpow.pop %v573
    %v575 = vadd.f32 %v574, 1.0
    %v576 = vrcp.pop %v575
    %v577 = vmul.f32 1.0, %v576
    %v578 = vxor.u32 %v569, 2147483648
    %v579 = vmul.f32 %v578, 1.442695
    %v580 = vpow.pop %v579
    %v581 = vadd.f32 %v580, 1.0
    %v582 = vrcp.pop %v581
    %v583 = vmul.f32 1.0, %v582
    %v584 = vtanh.pop %v570
    %v585 = vxor.u32 %v571, 2147483648
    %v586 = vmul.f32 %v585, 1.442695
    %v587 = vpow.pop %v586
    %v588 = vadd.f32 %v587, 1.0
    %v589 = vrcp.pop %v588
    %v590 = vmul.f32 1.0, %v589
    %v591 = vmul.f32 %v583, 0.0
    %v592 = vmul.f32 %v577, %v584
    %v593 = vadd.f32 %v591, %v592
    %v594 = vtanh.pop %v593
    %v595 = vmul.f32 %v590, %v594
    %596 = vmatprep.subr.mxu0 %v363
    %597 = vmatpush1.msra.mxu0 %v362
    %598 = vmatprep.subr.mxu0 %v367
    %599 = vmatpush1.msra.mxu0 %v366
    %600 = vmatprep.subr.mxu0 %v371
    %601 = vmatpush1.msra.mxu0 %v370
    %602 = vmatprep.subr.mxu0 %v375
    %603 = vmatpush1.msra.mxu0 %v374
    %604 = vmatprep.subr.mxu0 %v379
    %605 = vmatpush1.msra.mxu0 %v378
    %606 = vmatprep.subr.mxu0 %v383
    %607 = vmatpush1.msra.mxu0 %v382
    %608 = vmatprep.subr.mxu0 %v387
    %609 = vmatpush1.msra.mxu0 %v386
    %610 = vmatprep.subr.mxu0 %v391
    %611 = vmatpush1.msra.mxu0 %v390
    %612 = vmatprep.subr.mxu0 %v395
    %613 = vmatpush1.msra.mxu0 %v394
    %614 = vmatprep.subr.mxu0 %v399
    %615 = vmatpush1.msra.mxu0 %v398
    %616 = vmatprep.subr.mxu0 %v403
    %617 = vmatpush1.msra.mxu0 %v402
    %618 = vmatprep.subr.mxu0 %v407
    %619 = vmatpush1.msra.mxu0 %v406
    %620 = vmatprep.subr.mxu0 %v411
    %621 = vmatpush1.msra.mxu0 %v410
    %622 = vmatprep.subr.mxu0 %v415
    %623 = vmatpush1.msra.mxu0 %v414
    %624 = vmatprep.subr.mxu0 %v419
    %625 = vmatpush1.msra.mxu0 %v418
    %626 = vmatprep.subr.mxu0 %v423
    %627 = vmatpush1.msra.mxu0 %v422
    %628 = vmatprep.subr.mxu0 0.0
    %629 = vmatpush1.msra.mxu0 0.0
    %630 = vmatprep.subr.mxu0 0.0
    %631 = vmatpush1.msra.mxu0 0.0
    %632 = vmatprep.subr.mxu0 0.0
    %633 = vmatpush1.msra.mxu0 0.0
    %634 = vmatprep.subr.mxu0 0.0
    %635 = vmatpush1.msra.mxu0 0.0
    %636 = vmatprep.subr.mxu0 0.0
    %637 = vmatpush1.msra.mxu0 0.0
    %638 = vmatprep.subr.mxu0 0.0
    %639 = vmatpush1.msra.mxu0 0.0
    %640 = vmatprep.subr.mxu0 0.0
    %641 = vmatpush1.msra.mxu0 0.0
    %642 = vmatprep.subr.mxu0 0.0
    %643 = vmatpush1.msra.mxu0 0.0
    %644 = vmatprep.subr.mxu0 0.0
    %645 = vmatpush1.msra.mxu0 0.0
    %646 = vmatprep.subr.mxu0 0.0
    %647 = vmatpush1.msra.mxu0 0.0
    %648 = vmatprep.subr.mxu0 0.0
    %649 = vmatpush1.msra.mxu0 0.0
    %650 = vmatprep.subr.mxu0 0.0
    %651 = vmatpush1.msra.mxu0 0.0
    %652 = vmatprep.subr.mxu0 0.0
    %653 = vmatpush1.msra.mxu0 0.0
    %654 = vmatprep.subr.mxu0 0.0
    %655 = vmatpush1.msra.mxu0 0.0
    %656 = vmatprep.subr.mxu0 0.0
    %657 = vmatpush1.msra.mxu0 0.0
    %658 = vmatprep.subr.mxu0 0.0
    %659 = vmatpush1.msra.mxu0 0.0
    %660 = vmatprep.mubr.f32.mxu0 0.0
    %661 = vmatmul.mubr.f32.gmra.mrb[0].mxu0 %v595
    %v662 = vpop.f32.mrb[0].mxu0
    %v663 = vadd.f32 0.0, %v662
    %v664 = vpop.f32.mrb[0].mxu0
    %v665 = vadd.f32 0.0, %v664
    %666 = vdwg.mxu0
    %667 = vmatprep.subr.mxu0 %v365
    %668 = vmatpush1.msra.mxu0 %v364
    %669 = vmatprep.subr.mxu0 %v369
    %670 = vmatpush1.msra.mxu0 %v368
    %671 = vmatprep.subr.mxu0 %v373
    %672 = vmatpush1.msra.mxu0 %v372
    %673 = vmatprep.subr.mxu0 %v377
    %674 = vmatpush1.msra.mxu0 %v376
    %675 = vmatprep.subr.mxu0 %v381
    %676 = vmatpush1.msra.mxu0 %v380
    %677 = vmatprep.subr.mxu0 %v385
    %678 = vmatpush1.msra.mxu0 %v384
    %679 = vmatprep.subr.mxu0 %v389
    %680 = vmatpush1.msra.mxu0 %v388
    %681 = vmatprep.subr.mxu0 %v393
    %682 = vmatpush1.msra.mxu0 %v392
    %683 = vmatprep.subr.mxu0 %v397
    %684 = vmatpush1.msra.mxu0 %v396
    %685 = vmatprep.subr.mxu0 %v401
    %686 = vmatpush1.msra.mxu0 %v400
    %687 = vmatprep.subr.mxu0 %v405
    %688 = vmatpush1.msra.mxu0 %v404
    %689 = vmatprep.subr.mxu0 %v409
    %690 = vmatpush1.msra.mxu0 %v408
    %691 = vmatprep.subr.mxu0 %v413
    %692 = vmatpush1.msra.mxu0 %v412
    %693 = vmatprep.subr.mxu0 %v417
    %694 = vmatpush1.msra.mxu0 %v416
    %695 = vmatprep.subr.mxu0 %v421
    %696 = vmatpush1.msra.mxu0 %v420
    %697 = vmatprep.subr.mxu0 %v425
    %698 = vmatpush1.msra.mxu0 %v424
    %699 = vmatprep.subr.mxu0 0.0
    %700 = vmatpush1.msra.mxu0 0.0
    %701 = vmatprep.subr.mxu0 0.0
    %702 = vmatpush1.msra.mxu0 0.0
    %703 = vmatprep.subr.mxu0 0.0
    %704 = vmatpush1.msra.mxu0 0.0
    %705 = vmatprep.subr.mxu0 0.0
    %706 = vmatpush1.msra.mxu0 0.0
    %707 = vmatprep.subr.mxu0 0.0
    %708 = vmatpush1.msra.mxu0 0.0
    %709 = vmatprep.subr.mxu0 0.0
    %710 = vmatpush1.msra.mxu0 0.0
    %711 = vmatprep.subr.mxu0 0.0
    %712 = vmatpush1.msra.mxu0 0.0
    %713 = vmatprep.subr.mxu0 0.0
    %714 = vmatpush1.msra.mxu0 0.0
    %715 = vmatprep.subr.mxu0 0.0
    %716 = vmatpush1.msra.mxu0 0.0
    %717 = vmatprep.subr.mxu0 0.0
    %718 = vmatpush1.msra.mxu0 0.0
    %719 = vmatprep.subr.mxu0 0.0
    %720 = vmatpush1.msra.mxu0 0.0
    %721 = vmatprep.subr.mxu0 0.0
    %722 = vmatpush1.msra.mxu0 0.0
    %723 = vmatprep.subr.mxu0 0.0
    %724 = vmatpush1.msra.mxu0 0.0
    %725 = vmatprep.subr.mxu0 0.0
    %726 = vmatpush1.msra.mxu0 0.0
    %727 = vmatprep.subr.mxu0 0.0
    %728 = vmatpush1.msra.mxu0 0.0
    %729 = vmatprep.subr.mxu0 0.0
    %730 = vmatpush1.msra.mxu0 0.0
    %731 = vmatprep.mubr.f32.mxu0 0.0
    %732 = vmatmul.mubr.f32.gmra.mrb[0].mxu0 %v595
    %v733 = vpop.f32.mrb[0].mxu0
    %v734 = vadd.f32 0.0, %v733
    %v735 = vpop.f32.mrb[0].mxu0
    %v736 = vadd.f32 0.0, %v735
    %737 = vdwg.mxu0
    %v738 = vadd.f32 %v209, %v663
    %v739 = vadd.f32 %v211, %v665
    %v740 = vadd.f32 %v322, %v734
    %v741 = vadd.f32 %v324, %v736
    %v742 = vxor.u32 %v738, 2147483648
    %v743 = vmul.f32 %v742, 1.442695
    %v744 = vpow.pop %v743
    %v745 = vadd.f32 %v744, 1.0
    %v746 = vrcp.pop %v745
    %v747 = vmul.f32 1.0, %v746
    %v748 = vxor.u32 %v739, 2147483648
    %v749 = vmul.f32 %v748, 1.442695
    %v750 = vpow.pop %v749
    %v751 = vadd.f32 %v750, 1.0
    %v752 = vrcp.pop %v751
    %v753 = vmul.f32 1.0, %v752
    %v754 = vtanh.pop %v740
    %v755 = vxor.u32 %v741, 2147483648
    %v756 = vmul.f32 %v755, 1.442695
    %v757 = vpow.pop %v756
    %v758 = vadd.f32 %v757, 1.0
    %v759 = vrcp.pop %v758
    %v760 = vmul.f32 1.0, %v759
    %v761 = vmul.f32 %v753, %v593
    %v762 = vmul.f32 %v747, %v754
    %v763 = vadd.f32 %v761, %v762
    %v764 = vtanh.pop %v763
    %v765 = vmul.f32 %v760, %v764
    %766 = vmatprep.subr.mxu0 %v363
    %767 = vmatpush1.msra.mxu0 %v362
    %768 = vmatprep.subr.mxu0 %v367
    %769 = vmatpush1.msra.mxu0 %v366
    %770 = vmatprep.subr.mxu0 %v371
    %771 = vmatpush1.msra.mxu0 %v370
    %772 = vmatprep.subr.mxu0 %v375
    %773 = vmatpush1.msra.mxu0 %v374
    %774 = vmatprep.subr.mxu0 %v379
    %775 = vmatpush1.msra.mxu0 %v378
    %776 = vmatprep.subr.mxu0 %v383
    %777 = vmatpush1.msra.mxu0 %v382
    %778 = vmatprep.subr.mxu0 %v387
    %779 = vmatpush1.msra.mxu0 %v386
    %780 = vmatprep.subr.mxu0 %v391
    %781 = vmatpush1.msra.mxu0 %v390
    %782 = vmatprep.subr.mxu0 %v395
    %783 = vmatpush1.msra.mxu0 %v394
    %784 = vmatprep.subr.mxu0 %v399
    %785 = vmatpush1.msra.mxu0 %v398
    %786 = vmatprep.subr.mxu0 %v403
    %787 = vmatpush1.msra.mxu0 %v402
    %788 = vmatprep.subr.mxu0 %v407
    %789 = vmatpush1.msra.mxu0 %v406
    %790 = vmatprep.subr.mxu0 %v411
    %791 = vmatpush1.msra.mxu0 %v410
    %792 = vmatprep.subr.mxu0 %v415
    %793 = vmatpush1.msra.mxu0 %v414
    %794 = vmatprep.subr.mxu0 %v419
    %795 = vmatpush1.msra.mxu0 %v418
    %796 = vmatprep.subr.mxu0 %v423
    %797 = vmatpush1.msra.mxu0 %v422
    %798 = vmatprep.subr.mxu0 0.0
    %799 = vmatpush1.msra.mxu0 0.0
    %800 = vmatprep.subr.mxu0 0.0
    %801 = vmatpush1.msra.mxu0 0.0
    %802 = vmatprep.subr.mxu0 0.0
    %803 = vmatpush1.msra.mxu0 0.0
    %804 = vmatprep.subr.mxu0 0.0
    %805 = vmatpush1.msra.mxu0 0.0
    %806 = vmatprep.subr.mxu0 0.0
    %807 = vmatpush1.msra.mxu0 0.0
    %808 = vmatprep.subr.mxu0 0.0
    %809 = vmatpush1.msra.mxu0 0.0
    %810 = vmatprep.subr.mxu0 0.0
    %811 = vmatpush1.msra.mxu0 0.0
    %812 = vmatprep.subr.mxu0 0.0
    %813 = vmatpush1.msra.mxu0 0.0
    %814 = vmatprep.subr.mxu0 0.0
    %815 = vmatpush1.msra.mxu0 0.0
    %816 = vmatprep.subr.mxu0 0.0
    %817 = vmatpush1.msra.mxu0 0.0
    %818 = vmatprep.subr.mxu0 0.0
    %819 = vmatpush1.msra.mxu0 0.0
    %820 = vmatprep.subr.mxu0 0.0
    %821 = vmatpush1.msra.mxu0 0.0
    %822 = vmatprep.subr.mxu0 0.0
    %823 = vmatpush1.msra.mxu0 0.0
    %824 = vmatprep.subr.mxu0 0.0
    %825 = vmatpush1.msra.mxu0 0.0
    %826 = vmatprep.subr.mxu0 0.0
    %827 = vmatpush1.msra.mxu0 0.0
    %828 = vmatprep.subr.mxu0 0.0
    %829 = vmatpush1.msra.mxu0 0.0
    %830 = vmatprep.mubr.f32.mxu0 0.0
    %831 = vmatmul.mubr.f32.gmra.mrb[0].mxu0 %v765
    %v832 = vpop.f32.mrb[0].mxu0
    %v833 = vadd.f32 0.0, %v832
    %v834 = vpop.f32.mrb[0].mxu0
    %v835 = vadd.f32 0.0, %v834
    %836 = vdwg.mxu0
    %837 = vmatprep.subr.mxu0 %v365
    %838 = vmatpush1.msra.mxu0 %v364
    %839 = vmatprep.subr.mxu0 %v369
    %840 = vmatpush1.msra.mxu0 %v368
    %841 = vmatprep.subr.mxu0 %v373
    %842 = vmatpush1.msra.mxu0 %v372
    %843 = vmatprep.subr.mxu0 %v377
    %844 = vmatpush1.msra.mxu0 %v376
    %845 = vmatprep.subr.mxu0 %v381
    %846 = vmatpush1.msra.mxu0 %v380
    %847 = vmatprep.subr.mxu0 %v385
    %848 = vmatpush1.msra.mxu0 %v384
    %849 = vmatprep.subr.mxu0 %v389
    %850 = vmatpush1.msra.mxu0 %v388
    %851 = vmatprep.subr.mxu0 %v393
    %852 = vmatpush1.msra.mxu0 %v392
    %853 = vmatprep.subr.mxu0 %v397
    %854 = vmatpush1.msra.mxu0 %v396
    %855 = vmatprep.subr.mxu0 %v401
    %856 = vmatpush1.msra.mxu0 %v400
    %857 = vmatprep.subr.mxu0 %v405
    %858 = vmatpush1.msra.mxu0 %v404
    %859 = vmatprep.subr.mxu0 %v409
    %860 = vmatpush1.msra.mxu0 %v408
    %861 = vmatprep.subr.mxu0 %v413
    %862 = vmatpush1.msra.mxu0 %v412
    %863 = vmatprep.subr.mxu0 %v417
    %864 = vmatpush1.msra.mxu0 %v416
    %865 = vmatprep.subr.mxu0 %v421
    %866 = vmatpush1.msra.mxu0 %v420
    %867 = vmatprep.subr.mxu0 %v425
    %868 = vmatpush1.msra.mxu0 %v424
    %869 = vmatprep.subr.mxu0 0.0
    %870 = vmatpush1.msra.mxu0 0.0
    %871 = vmatprep.subr.mxu0 0.0
    %872 = vmatpush1.msra.mxu0 0.0
    %873 = vmatprep.subr.mxu0 0.0
    %874 = vmatpush1.msra.mxu0 0.0
    %875 = vmatprep.subr.mxu0 0.0
    %876 = vmatpush1.msra.mxu0 0.0
    %877 = vmatprep.subr.mxu0 0.0
    %878 = vmatpush1.msra.mxu0 0.0
    %879 = vmatprep.subr.mxu0 0.0
    %880 = vmatpush1.msra.mxu0 0.0
    %881 = vmatprep.subr.mxu0 0.0
    %882 = vmatpush1.msra.mxu0 0.0
    %883 = vmatprep.subr.mxu0 0.0
    %884 = vmatpush1.msra.mxu0 0.0
    %885 = vmatprep.subr.mxu0 0.0
    %886 = vmatpush1.msra.mxu0 0.0
    %887 = vmatprep.subr.mxu0 0.0
    %888 = vmatpush1.msra.mxu0 0.0
    %889 = vmatprep.subr.mxu0 0.0
    %890 = vmatpush1.msra.mxu0 0.0
    %891 = vmatprep.subr.mxu0 0.0
    %892 = vmatpush1.msra.mxu0 0.0
    %893 = vmatprep.subr.mxu0 0.0
    %894 = vmatpush1.msra.mxu0 0.0
    %895 = vmatprep.subr.mxu0 0.0
    %896 = vmatpush1.msra.mxu0 0.0
    %897 = vmatprep.subr.mxu0 0.0
    %898 = vmatpush1.msra.mxu0 0.0
    %899 = vmatprep.subr.mxu0 0.0
    %900 = vmatpush1.msra.mxu0 0.0
    %901 = vmatprep.mubr.f32.mxu0 0.0
    %902 = vmatmul.mubr.f32.gmra.mrb[0].mxu0 %v765
    %v903 = vpop.f32.mrb[0].mxu0
    %v904 = vadd.f32 0.0, %v903
    %v905 = vpop.f32.mrb[0].mxu0
    %v906 = vadd.f32 0.0, %v905
    %907 = vdwg.mxu0
    %v908 = vadd.f32 %v215, %v833
    %v909 = vadd.f32 %v217, %v835
    %v910 = vadd.f32 %v328, %v904
    %v911 = vadd.f32 %v330, %v906
    %v912 = vxor.u32 %v908, 2147483648
    %v913 = vmul.f32 %v912, 1.442695
    %v914 = vpow.pop %v913
    %v915 = vadd.f32 %v914, 1.0
    %v916 = vrcp.pop %v915
    %v917 = vmul.f32 1.0, %v916
    %v918 = vxor.u32 %v909, 2147483648
    %v919 = vmul.f32 %v918, 1.442695
    %v920 = vpow.pop %v919
    %v921 = vadd.f32 %v920, 1.0
    %v922 = vrcp.pop %v921
    %v923 = vmul.f32 1.0, %v922
    %v924 = vtanh.pop %v910
    %v925 = vxor.u32 %v911, 2147483648
    %v926 = vmul.f32 %v925, 1.442695
    %v927 = vpow.pop %v926
    %v928 = vadd.f32 %v927, 1.0
    %v929 = vrcp.pop %v928
    %v930 = vmul.f32 1.0, %v929
    %v931 = vmul.f32 %v923, %v763
    %v932 = vmul.f32 %v917, %v924
    %v933 = vadd.f32 %v931, %v932
    %v934 = vtanh.pop %v933
    %v935 = vmul.f32 %v930, %v934
    %936 = vmatprep.subr.mxu0 %v363
    %937 = vmatpush1.msra.mxu0 %v362
    %938 = vmatprep.subr.mxu0 %v367
    %939 = vmatpush1.msra.mxu0 %v366
    %940 = vmatprep.subr.mxu0 %v371
    %941 = vmatpush1.msra.mxu0 %v370
    %942 = vmatprep.subr.mxu0 %v375
    %943 = vmatpush1.msra.mxu0 %v374
    %944 = vmatprep.subr.mxu0 %v379
    %945 = vmatpush1.msra.mxu0 %v378
    %946 = vmatprep.subr.mxu0 %v383
    %947 = vmatpush1.msra.mxu0 %v382
    %948 = vmatprep.subr.mxu0 %v387
    %949 = vmatpush1.msra.mxu0 %v386
    %950 = vmatprep.subr.mxu0 %v391
    %951 = vmatpush1.msra.mxu0 %v390
    %952 = vmatprep.subr.mxu0 %v395
    %953 = vmatpush1.msra.mxu0 %v394
    %954 = vmatprep.subr.mxu0 %v399
    %955 = vmatpush1.msra.mxu0 %v398
    %956 = vmatprep.subr.mxu0 %v403
    %957 = vmatpush1.msra.mxu0 %v402
    %958 = vmatprep.subr.mxu0 %v407
    %959 = vmatpush1.msra.mxu0 %v406
    %960 = vmatprep.subr.mxu0 %v411
    %961 = vmatpush1.msra.mxu0 %v410
    %962 = vmatprep.subr.mxu0 %v415
    %963 = vmatpush1.msra.mxu0 %v414
    %964 = vmatprep.subr.mxu0 %v419
    %965 = vmatpush1.msra.mxu0 %v418
    %966 = vmatprep.subr.mxu0 %v423
    %967 = vmatpush1.msra.mxu0 %v422
    %968 = vmatprep.subr.mxu0 0.0
    %969 = vmatpush1.msra.mxu0 0.0
    %970 = vmatprep.subr.mxu0 0.0
    %971 = vmatpush1.msra.mxu0 0.0
    %972 = vmatprep.subr.mxu0 0.0
    %973 = vmatpush1.msra.mxu0 0.0
    %974 = vmatprep.subr.mxu0 0.0
    %975 = vmatpush1.msra.mxu0 0.0
    %976 = vmatprep.subr.mxu0 0.0
    %977 = vmatpush1.msra.mxu0 0.0
    %978 = vmatprep.subr.mxu0 0.0
    %979 = vmatpush1.msra.mxu0 0.0
    %980 = vmatprep.subr.mxu0 0.0
    %981 = vmatpush1.msra.mxu0 0.0
    %982 = vmatprep.subr.mxu0 0.0
    %983 = vmatpush1.msra.mxu0 0.0
    %984 = vmatprep.subr.mxu0 0.0
    %985 = vmatpush1.msra.mxu0 0.0
    %986 = vmatprep.subr.mxu0 0.0
    %987 = vmatpush1.msra.mxu0 0.0
    %988 = vmatprep.subr.mxu0 0.0
    %989 = vmatpush1.msra.mxu0 0.0
    %990 = vmatprep.subr.mxu0 0.0
    %991 = vmatpush1.msra.mxu0 0.0
    %992 = vmatprep.subr.mxu0 0.0
    %993 = vmatpush1.msra.mxu0 0.0
    %994 = vmatprep.subr.mxu0 0.0
    %995 = vmatpush1.msra.mxu0 0.0
    %996 = vmatprep.subr.mxu0 0.0
    %997 = vmatpush1.msra.mxu0 0.0
    %998 = vmatprep.subr.mxu0 0.0
    %999 = vmatpush1.msra.mxu0 0.0
    %1000 = vmatprep.mubr.f32.mxu0 0.0
    %1001 = vmatmul.mubr.f32.gmra.mrb[0].mxu0 %v935
    %v1002 = vpop.f32.mrb[0].mxu0
    %v1003 = vadd.f32 0.0, %v1002
    %v1004 = vpop.f32.mrb[0].mxu0
    %v1005 = vadd.f32 0.0, %v1004
    %1006 = vdwg.mxu0
    %1007 = vmatprep.subr.mxu0 %v365
    %1008 = vmatpush1.msra.mxu0 %v364
    %1009 = vmatprep.subr.mxu0 %v369
    %1010 = vmatpush1.msra.mxu0 %v368
    %1011 = vmatprep.subr.mxu0 %v373
    %1012 = vmatpush1.msra.mxu0 %v372
    %1013 = vmatprep.subr.mxu0 %v377
    %1014 = vmatpush1.msra.mxu0 %v376
    %1015 = vmatprep.subr.mxu0 %v381
    %1016 = vmatpush1.msra.mxu0 %v380
    %1017 = vmatprep.subr.mxu0 %v385
    %1018 = vmatpush1.msra.mxu0 %v384
    %1019 = vmatprep.subr.mxu0 %v389
    %1020 = vmatpush1.msra.mxu0 %v388
    %1021 = vmatprep.subr.mxu0 %v393
    %1022 = vmatpush1.msra.mxu0 %v392
    %1023 = vmatprep.subr.mxu0 %v397
    %1024 = vmatpush1.msra.mxu0 %v396
    %1025 = vmatprep.subr.mxu0 %v401
    %1026 = vmatpush1.msra.mxu0 %v400
    %1027 = vmatprep.subr.mxu0 %v405
    %1028 = vmatpush1.msra.mxu0 %v404
    %1029 = vmatprep.subr.mxu0 %v409
    %1030 = vmatpush1.msra.mxu0 %v408
    %1031 = vmatprep.subr.mxu0 %v413
    %1032 = vmatpush1.msra.mxu0 %v412
    %1033 = vmatprep.subr.mxu0 %v417
    %1034 = vmatpush1.msra.mxu0 %v416
    %1035 = vmatprep.subr.mxu0 %v421
    %1036 = vmatpush1.msra.mxu0 %v420
    %1037 = vmatprep.subr.mxu0 %v425
    %1038 = vmatpush1.msra.mxu0 %v424
    %1039 = vmatprep.subr.mxu0 0.0
    %1040 = vmatpush1.msra.mxu0 0.0
    %1041 = vmatprep.subr.mxu0 0.0
    %1042 = vmatpush1.msra.mxu0 0.0
    %1043 = vmatprep.subr.mxu0 0.0
    %1044 = vmatpush1.msra.mxu0 0.0
    %1045 = vmatprep.subr.mxu0 0.0
    %1046 = vmatpush1.msra.mxu0 0.0
    %1047 = vmatprep.subr.mxu0 0.0
    %1048 = vmatpush1.msra.mxu0 0.0
    %1049 = vmatprep.subr.mxu0 0.0
    %1050 = vmatpush1.msra.mxu0 0.0
    %1051 = vmatprep.subr.mxu0 0.0
    %1052 = vmatpush1.msra.mxu0 0.0
    %1053 = vmatprep.subr.mxu0 0.0
    %1054 = vmatpush1.msra.mxu0 0.0
    %1055 = vmatprep.subr.mxu0 0.0
    %1056 = vmatpush1.msra.mxu0 0.0
    %1057 = vmatprep.subr.mxu0 0.0
    %1058 = vmatpush1.msra.mxu0 0.0
    %1059 = vmatprep.subr.mxu0 0.0
    %1060 = vmatpush1.msra.mxu0 0.0
    %1061 = vmatprep.subr.mxu0 0.0
    %1062 = vmatpush1.msra.mxu0 0.0
    %1063 = vmatprep.subr.mxu0 0.0
    %1064 = vmatpush1.msra.mxu0 0.0
    %1065 = vmatprep.subr.mxu0 0.0
    %1066 = vmatpush1.msra.mxu0 0.0
    %1067 = vmatprep.subr.mxu0 0.0
    %1068 = vmatpush1.msra.mxu0 0.0
    %1069 = vmatprep.subr.mxu0 0.0
    %1070 = vmatpush1.msra.mxu0 0.0
    %1071 = vmatprep.mubr.f32.mxu0 0.0
    %1072 = vmatmul.mubr.f32.gmra.mrb[0].mxu0 %v935
    %v1073 = vpop.f32.mrb[0].mxu0
    %v1074 = vadd.f32 0.0, %v1073
    %v1075 = vpop.f32.mrb[0].mxu0
    %v1076 = vadd.f32 0.0, %v1075
    %1077 = vdwg.mxu0
    %v1078 = vadd.f32 %v221, %v1003
    %v1079 = vadd.f32 %v223, %v1005
    %v1080 = vadd.f32 %v334, %v1074
    %v1081 = vadd.f32 %v336, %v1076
    %v1082 = vxor.u32 %v1078, 2147483648
    %v1083 = vmul.f32 %v1082, 1.442695
    %v1084 = vpow.pop %v1083
    %v1085 = vadd.f32 %v1084, 1.0
    %v1086 = vrcp.pop %v1085
    %v1087 = vmul.f32 1.0, %v1086
    %v1088 = vxor.u32 %v1079, 2147483648
    %v1089 = vmul.f32 %v1088, 1.442695
    %v1090 = vpow.pop %v1089
    %v1091 = vadd.f32 %v1090, 1.0
    %v1092 = vrcp.pop %v1091
    %v1093 = vmul.f32 1.0, %v1092
    %v1094 = vtanh.pop %v1080
    %v1095 = vxor.u32 %v1081, 2147483648
    %v1096 = vmul.f32 %v1095, 1.442695
    %v1097 = vpow.pop %v1096
    %v1098 = vadd.f32 %v1097, 1.0
    %v1099 = vrcp.pop %v1098
    %v1100 = vmul.f32 1.0, %v1099
    %v1101 = vmul.f32 %v1093, %v933
    %v1102 = vmul.f32 %v1087, %v1094
    %v1103 = vadd.f32 %v1101, %v1102
    %v1104 = vtanh.pop %v1103
    %v1105 = vmul.f32 %v1100, %v1104
    %1106 = vmatprep.subr.mxu0 %v363
    %1107 = vmatpush1.msra.mxu0 %v362
    %1108 = vmatprep.subr.mxu0 %v367
    %1109 = vmatpush1.msra.mxu0 %v366
    %1110 = vmatprep.subr.mxu0 %v371
    %1111 = vmatpush1.msra.mxu0 %v370
    %1112 = vmatprep.subr.mxu0 %v375
    %1113 = vmatpush1.msra.mxu0 %v374
    %1114 = vmatprep.subr.mxu0 %v379
    %1115 = vmatpush1.msra.mxu0 %v378
    %1116 = vmatprep.subr.mxu0 %v383
    %1117 = vmatpush1.msra.mxu0 %v382
    %1118 = vmatprep.subr.mxu0 %v387
    %1119 = vmatpush1.msra.mxu0 %v386
    %1120 = vmatprep.subr.mxu0 %v391
    %1121 = vmatpush1.msra.mxu0 %v390
    %1122 = vmatprep.subr.mxu0 %v395
    %1123 = vmatpush1.msra.mxu0 %v394
    %1124 = vmatprep.subr.mxu0 %v399
    %1125 = vmatpush1.msra.mxu0 %v398
    %1126 = vmatprep.subr.mxu0 %v403
    %1127 = vmatpush1.msra.mxu0 %v402
    %1128 = vmatprep.subr.mxu0 %v407
    %1129 = vmatpush1.msra.mxu0 %v406
    %1130 = vmatprep.subr.mxu0 %v411
    %1131 = vmatpush1.msra.mxu0 %v410
    %1132 = vmatprep.subr.mxu0 %v415
    %1133 = vmatpush1.msra.mxu0 %v414
    %1134 = vmatprep.subr.mxu0 %v419
    %1135 = vmatpush1.msra.mxu0 %v418
    %1136 = vmatprep.subr.mxu0 %v423
    %1137 = vmatpush1.msra.mxu0 %v422
    %1138 = vmatprep.subr.mxu0 0.0
    %1139 = vmatpush1.msra.mxu0 0.0
    %1140 = vmatprep.subr.mxu0 0.0
    %1141 = vmatpush1.msra.mxu0 0.0
    %1142 = vmatprep.subr.mxu0 0.0
    %1143 = vmatpush1.msra.mxu0 0.0
    %1144 = vmatprep.subr.mxu0 0.0
    %1145 = vmatpush1.msra.mxu0 0.0
    %1146 = vmatprep.subr.mxu0 0.0
    %1147 = vmatpush1.msra.mxu0 0.0
    %1148 = vmatprep.subr.mxu0 0.0
    %1149 = vmatpush1.msra.mxu0 0.0
    %1150 = vmatprep.subr.mxu0 0.0
    %1151 = vmatpush1.msra.mxu0 0.0
    %1152 = vmatprep.subr.mxu0 0.0
    %1153 = vmatpush1.msra.mxu0 0.0
    %1154 = vmatprep.subr.mxu0 0.0
    %1155 = vmatpush1.msra.mxu0 0.0
    %1156 = vmatprep.subr.mxu0 0.0
    %1157 = vmatpush1.msra.mxu0 0.0
    %1158 = vmatprep.subr.mxu0 0.0
    %1159 = vmatpush1.msra.mxu0 0.0
    %1160 = vmatprep.subr.mxu0 0.0
    %1161 = vmatpush1.msra.mxu0 0.0
    %1162 = vmatprep.subr.mxu0 0.0
    %1163 = vmatpush1.msra.mxu0 0.0
    %1164 = vmatprep.subr.mxu0 0.0
    %1165 = vmatpush1.msra.mxu0 0.0
    %1166 = vmatprep.subr.mxu0 0.0
    %1167 = vmatpush1.msra.mxu0 0.0
    %1168 = vmatprep.subr.mxu0 0.0
    %1169 = vmatpush1.msra.mxu0 0.0
    %1170 = vmatprep.mubr.f32.mxu0 0.0
    %1171 = vmatmul.mubr.f32.gmra.mrb[0].mxu0 %v1105
    %v1172 = vpop.f32.mrb[0].mxu0
    %v1173 = vadd.f32 0.0, %v1172
    %v1174 = vpop.f32.mrb[0].mxu0
    %v1175 = vadd.f32 0.0, %v1174
    %1176 = vdwg.mxu0
    %1177 = vmatprep.subr.mxu0 %v365
    %1178 = vmatpush1.msra.mxu0 %v364
    %1179 = vmatprep.subr.mxu0 %v369
    %1180 = vmatpush1.msra.mxu0 %v368
    %1181 = vmatprep.subr.mxu0 %v373
    %1182 = vmatpush1.msra.mxu0 %v372
    %1183 = vmatprep.subr.mxu0 %v377
    %1184 = vmatpush1.msra.mxu0 %v376
    %1185 = vmatprep.subr.mxu0 %v381
    %1186 = vmatpush1.msra.mxu0 %v380
    %1187 = vmatprep.subr.mxu0 %v385
    %1188 = vmatpush1.msra.mxu0 %v384
    %1189 = vmatprep.subr.mxu0 %v389
    %1190 = vmatpush1.msra.mxu0 %v388
    %1191 = vmatprep.subr.mxu0 %v393
    %1192 = vmatpush1.msra.mxu0 %v392
    %1193 = vmatprep.subr.mxu0 %v397
    %1194 = vmatpush1.msra.mxu0 %v396
    %1195 = vmatprep.subr.mxu0 %v401
    %1196 = vmatpush1.msra.mxu0 %v400
    %1197 = vmatprep.subr.mxu0 %v405
    %1198 = vmatpush1.msra.mxu0 %v404
    %1199 = vmatprep.subr.mxu0 %v409
    %1200 = vmatpush1.msra.mxu0 %v408
    %1201 = vmatprep.subr.mxu0 %v413
    %1202 = vmatpush1.msra.mxu0 %v412
    %1203 = vmatprep.subr.mxu0 %v417
    %1204 = vmatpush1.msra.mxu0 %v416
    %1205 = vmatprep.subr.mxu0 %v421
    %1206 = vmatpush1.msra.mxu0 %v420
    %1207 = vmatprep.subr.mxu0 %v425
    %1208 = vmatpush1.msra.mxu0 %v424
    %1209 = vmatprep.subr.mxu0 0.0
    %1210 = vmatpush1.msra.mxu0 0.0
    %1211 = vmatprep.subr.mxu0 0.0
    %1212 = vmatpush1.msra.mxu0 0.0
    %1213 = vmatprep.subr.mxu0 0.0
    %1214 = vmatpush1.msra.mxu0 0.0
    %1215 = vmatprep.subr.mxu0 0.0
    %1216 = vmatpush1.msra.mxu0 0.0
    %1217 = vmatprep.subr.mxu0 0.0
    %1218 = vmatpush1.msra.mxu0 0.0
    %1219 = vmatprep.subr.mxu0 0.0
    %1220 = vmatpush1.msra.mxu0 0.0
    %1221 = vmatprep.subr.mxu0 0.0
    %1222 = vmatpush1.msra.mxu0 0.0
    %1223 = vmatprep.subr.mxu0 0.0
    %1224 = vmatpush1.msra.mxu0 0.0
    %1225 = vmatprep.subr.mxu0 0.0
    %1226 = vmatpush1.msra.mxu0 0.0
    %1227 = vmatprep.subr.mxu0 0.0
    %1228 = vmatpush1.msra.mxu0 0.0
    %1229 = vmatprep.subr.mxu0 0.0
    %1230 = vmatpush1.msra.mxu0 0.0
    %1231 = vmatprep.subr.mxu0 0.0
    %1232 = vmatpush1.msra.mxu0 0.0
    %1233 = vmatprep.subr.mxu0 0.0
    %1234 = vmatpush1.msra.mxu0 0.0
    %1235 = vmatprep.subr.mxu0 0.0
    %1236 = vmatpush1.msra.mxu0 0.0
    %1237 = vmatprep.subr.mxu0 0.0
    %1238 = vmatpush1.msra.mxu0 0.0
    %1239 = vmatprep.subr.mxu0 0.0
    %1240 = vmatpush1.msra.mxu0 0.0
    %1241 = vmatprep.mubr.f32.mxu0 0.0
    %1242 = vmatmul.mubr.f32.gmra.mrb[0].mxu0 %v1105
    %v1243 = vpop.f32.mrb[0].mxu0
    %v1244 = vadd.f32 0.0, %v1243
    %v1245 = vpop.f32.mrb[0].mxu0
    %v1246 = vadd.f32 0.0, %v1245
    %1247 = vdwg.mxu0
    %v1248 = vadd.f32 %v227, %v1173
    %v1249 = vadd.f32 %v229, %v1175
    %v1250 = vadd.f32 %v340, %v1244
    %v1251 = vadd.f32 %v342, %v1246
    %v1252 = vxor.u32 %v1248, 2147483648
    %v1253 = vmul.f32 %v1252, 1.442695
    %v1254 = vpow.pop %v1253
    %v1255 = vadd.f32 %v1254, 1.0
    %v1256 = vrcp.pop %v1255
    %v1257 = vmul.f32 1.0, %v1256
    %v1258 = vxor.u32 %v1249, 2147483648
    %v1259 = vmul.f32 %v1258, 1.442695
    %v1260 = vpow.pop %v1259
    %v1261 = vadd.f32 %v1260, 1.0
    %v1262 = vrcp.pop %v1261
    %v1263 = vmul.f32 1.0, %v1262
    %v1264 = vtanh.pop %v1250
    %v1265 = vxor.u32 %v1251, 2147483648
    %v1266 = vmul.f32 %v1265, 1.442695
    %v1267 = vpow.pop %v1266
    %v1268 = vadd.f32 %v1267, 1.0
    %v1269 = vrcp.pop %v1268
    %v1270 = vmul.f32 1.0, %v1269
    %v1271 = vmul.f32 %v1263, %v1103
    %v1272 = vmul.f32 %v1257, %v1264
    %v1273 = vadd.f32 %v1271, %v1272
    %v1274 = vtanh.pop %v1273
    %v1275 = vmul.f32 %v1270, %v1274
    %1276 = vmatprep.subr.mxu0 %v363
    %1277 = vmatpush1.msra.mxu0 %v362
    %1278 = vmatprep.subr.mxu0 %v367
    %1279 = vmatpush1.msra.mxu0 %v366
    %1280 = vmatprep.subr.mxu0 %v371
    %1281 = vmatpush1.msra.mxu0 %v370
    %1282 = vmatprep.subr.mxu0 %v375
    %1283 = vmatpush1.msra.mxu0 %v374
    %1284 = vmatprep.subr.mxu0 %v379
    %1285 = vmatpush1.msra.mxu0 %v378
    %1286 = vmatprep.subr.mxu0 %v383
    %1287 = vmatpush1.msra.mxu0 %v382
    %1288 = vmatprep.subr.mxu0 %v387
    %1289 = vmatpush1.msra.mxu0 %v386
    %1290 = vmatprep.subr.mxu0 %v391
    %1291 = vmatpush1.msra.mxu0 %v390
    %1292 = vmatprep.subr.mxu0 %v395
    %1293 = vmatpush1.msra.mxu0 %v394
    %1294 = vmatprep.subr.mxu0 %v399
    %1295 = vmatpush1.msra.mxu0 %v398
    %1296 = vmatprep.subr.mxu0 %v403
    %1297 = vmatpush1.msra.mxu0 %v402
    %1298 = vmatprep.subr.mxu0 %v407
    %1299 = vmatpush1.msra.mxu0 %v406
    %1300 = vmatprep.subr.mxu0 %v411
    %1301 = vmatpush1.msra.mxu0 %v410
    %1302 = vmatprep.subr.mxu0 %v415
    %1303 = vmatpush1.msra.mxu0 %v414
    %1304 = vmatprep.subr.mxu0 %v419
    %1305 = vmatpush1.msra.mxu0 %v418
    %1306 = vmatprep.subr.mxu0 %v423
    %1307 = vmatpush1.msra.mxu0 %v422
    %1308 = vmatprep.subr.mxu0 0.0
    %1309 = vmatpush1.msra.mxu0 0.0
    %1310 = vmatprep.subr.mxu0 0.0
    %1311 = vmatpush1.msra.mxu0 0.0
    %1312 = vmatprep.subr.mxu0 0.0
    %1313 = vmatpush1.msra.mxu0 0.0
    %1314 = vmatprep.subr.mxu0 0.0
    %1315 = vmatpush1.msra.mxu0 0.0
    %1316 = vmatprep.subr.mxu0 0.0
    %1317 = vmatpush1.msra.mxu0 0.0
    %1318 = vmatprep.subr.mxu0 0.0
    %1319 = vmatpush1.msra.mxu0 0.0
    %1320 = vmatprep.subr.mxu0 0.0
    %1321 = vmatpush1.msra.mxu0 0.0
    %1322 = vmatprep.subr.mxu0 0.0
    %1323 = vmatpush1.msra.mxu0 0.0
    %1324 = vmatprep.subr.mxu0 0.0
    %1325 = vmatpush1.msra.mxu0 0.0
    %1326 = vmatprep.subr.mxu0 0.0
    %1327 = vmatpush1.msra.mxu0 0.0
    %1328 = vmatprep.subr.mxu0 0.0
    %1329 = vmatpush1.msra.mxu0 0.0
    %1330 = vmatprep.subr.mxu0 0.0
    %1331 = vmatpush1.msra.mxu0 0.0
    %1332 = vmatprep.subr.mxu0 0.0
    %1333 = vmatpush1.msra.mxu0 0.0
    %1334 = vmatprep.subr.mxu0 0.0
    %1335 = vmatpush1.msra.mxu0 0.0
    %1336 = vmatprep.subr.mxu0 0.0
    %1337 = vmatpush1.msra.mxu0 0.0
    %1338 = vmatprep.subr.mxu0 0.0
    %1339 = vmatpush1.msra.mxu0 0.0
    %1340 = vmatprep.mubr.f32.mxu0 0.0
    %1341 = vmatmul.mubr.f32.gmra.mrb[0].mxu0 %v1275
    %v1342 = vpop.f32.mrb[0].mxu0
    %v1343 = vadd.f32 0.0, %v1342
    %v1344 = vpop.f32.mrb[0].mxu0
    %v1345 = vadd.f32 0.0, %v1344
    %1346 = vdwg.mxu0
    %1347 = vmatprep.subr.mxu0 %v365
    %1348 = vmatpush1.msra.mxu0 %v364
    %1349 = vmatprep.subr.mxu0 %v369
    %1350 = vmatpush1.msra.mxu0 %v368
    %1351 = vmatprep.subr.mxu0 %v373
    %1352 = vmatpush1.msra.mxu0 %v372
    %1353 = vmatprep.subr.mxu0 %v377
    %1354 = vmatpush1.msra.mxu0 %v376
    %1355 = vmatprep.subr.mxu0 %v381
    %1356 = vmatpush1.msra.mxu0 %v380
    %1357 = vmatprep.subr.mxu0 %v385
    %1358 = vmatpush1.msra.mxu0 %v384
    %1359 = vmatprep.subr.mxu0 %v389
    %1360 = vmatpush1.msra.mxu0 %v388
    %1361 = vmatprep.subr.mxu0 %v393
    %1362 = vmatpush1.msra.mxu0 %v392
    %1363 = vmatprep.subr.mxu0 %v397
    %1364 = vmatpush1.msra.mxu0 %v396
    %1365 = vmatprep.subr.mxu0 %v401
    %1366 = vmatpush1.msra.mxu0 %v400
    %1367 = vmatprep.subr.mxu0 %v405
    %1368 = vmatpush1.msra.mxu0 %v404
    %1369 = vmatprep.subr.mxu0 %v409
    %1370 = vmatpush1.msra.mxu0 %v408
    %1371 = vmatprep.subr.mxu0 %v413
    %1372 = vmatpush1.msra.mxu0 %v412
    %1373 = vmatprep.subr.mxu0 %v417
    %1374 = vmatpush1.msra.mxu0 %v416
    %1375 = vmatprep.subr.mxu0 %v421
    %1376 = vmatpush1.msra.mxu0 %v420
    %1377 = vmatprep.subr.mxu0 %v425
    %1378 = vmatpush1.msra.mxu0 %v424
    %1379 = vmatprep.subr.mxu0 0.0
    %1380 = vmatpush1.msra.mxu0 0.0
    %1381 = vmatprep.subr.mxu0 0.0
    %1382 = vmatpush1.msra.mxu0 0.0
    %1383 = vmatprep.subr.mxu0 0.0
    %1384 = vmatpush1.msra.mxu0 0.0
    %1385 = vmatprep.subr.mxu0 0.0
    %1386 = vmatpush1.msra.mxu0 0.0
    %1387 = vmatprep.subr.mxu0 0.0
    %1388 = vmatpush1.msra.mxu0 0.0
    %1389 = vmatprep.subr.mxu0 0.0
    %1390 = vmatpush1.msra.mxu0 0.0
    %1391 = vmatprep.subr.mxu0 0.0
    %1392 = vmatpush1.msra.mxu0 0.0
    %1393 = vmatprep.subr.mxu0 0.0
    %1394 = vmatpush1.msra.mxu0 0.0
    %1395 = vmatprep.subr.mxu0 0.0
    %1396 = vmatpush1.msra.mxu0 0.0
    %1397 = vmatprep.subr.mxu0 0.0
    %1398 = vmatpush1.msra.mxu0 0.0
    %1399 = vmatprep.subr.mxu0 0.0
    %1400 = vmatpush1.msra.mxu0 0.0
    %1401 = vmatprep.subr.mxu0 0.0
    %1402 = vmatpush1.msra.mxu0 0.0
    %1403 = vmatprep.subr.mxu0 0.0
    %1404 = vmatpush1.msra.mxu0 0.0
    %1405 = vmatprep.subr.mxu0 0.0
    %1406 = vmatpush1.msra.mxu0 0.0
    %1407 = vmatprep.subr.mxu0 0.0
    %1408 = vmatpush1.msra.mxu0 0.0
    %1409 = vmatprep.subr.mxu0 0.0
    %1410 = vmatpush1.msra.mxu0 0.0
    %1411 = vmatprep.mubr.f32.mxu0 0.0
    %1412 = vmatmul.mubr.f32.gmra.mrb[0].mxu0 %v1275
    %v1413 = vpop.f32.mrb[0].mxu0
    %v1414 = vadd.f32 0.0, %v1413
    %v1415 = vpop.f32.mrb[0].mxu0
    %v1416 = vadd.f32 0.0, %v1415
    %1417 = vdwg.mxu0
    %v1418 = vadd.f32 %v233, %v1343
    %v1419 = vadd.f32 %v235, %v1345
    %v1420 = vadd.f32 %v346, %v1414
    %v1421 = vadd.f32 %v348, %v1416
    %v1422 = vxor.u32 %v1418, 2147483648
    %v1423 = vmul.f32 %v1422, 1.442695
    %v1424 = vpow.pop %v1423
    %v1425 = vadd.f32 %v1424, 1.0
    %v1426 = vrcp.pop %v1425
    %v1427 = vmul.f32 1.0, %v1426
    %v1428 = vxor.u32 %v1419, 2147483648
    %v1429 = vmul.f32 %v1428, 1.442695
    %v1430 = vpow.pop %v1429
    %v1431 = vadd.f32 %v1430, 1.0
    %v1432 = vrcp.pop %v1431
    %v1433 = vmul.f32 1.0, %v1432
    %v1434 = vtanh.pop %v1420
    %v1435 = vxor.u32 %v1421, 2147483648
    %v1436 = vmul.f32 %v1435, 1.442695
    %v1437 = vpow.pop %v1436
    %v1438 = vadd.f32 %v1437, 1.0
    %v1439 = vrcp.pop %v1438
    %v1440 = vmul.f32 1.0, %v1439
    %v1441 = vmul.f32 %v1433, %v1273
    %v1442 = vmul.f32 %v1427, %v1434
    %v1443 = vadd.f32 %v1441, %v1442
    %v1444 = vtanh.pop %v1443
    %v1445 = vmul.f32 %v1440, %v1444
    %1446 = vmatprep.subr.mxu0 %v363
    %1447 = vmatpush1.msra.mxu0 %v362
    %1448 = vmatprep.subr.mxu0 %v367
    %1449 = vmatpush1.msra.mxu0 %v366
    %1450 = vmatprep.subr.mxu0 %v371
    %1451 = vmatpush1.msra.mxu0 %v370
    %1452 = vmatprep.subr.mxu0 %v375
    %1453 = vmatpush1.msra.mxu0 %v374
    %1454 = vmatprep.subr.mxu0 %v379
    %1455 = vmatpush1.msra.mxu0 %v378
    %1456 = vmatprep.subr.mxu0 %v383
    %1457 = vmatpush1.msra.mxu0 %v382
    %1458 = vmatprep.subr.mxu0 %v387
    %1459 = vmatpush1.msra.mxu0 %v386
    %1460 = vmatprep.subr.mxu0 %v391
    %1461 = vmatpush1.msra.mxu0 %v390
    %1462 = vmatprep.subr.mxu0 %v395
    %1463 = vmatpush1.msra.mxu0 %v394
    %1464 = vmatprep.subr.mxu0 %v399
    %1465 = vmatpush1.msra.mxu0 %v398
    %1466 = vmatprep.subr.mxu0 %v403
    %1467 = vmatpush1.msra.mxu0 %v402
    %1468 = vmatprep.subr.mxu0 %v407
    %1469 = vmatpush1.msra.mxu0 %v406
    %1470 = vmatprep.subr.mxu0 %v411
    %1471 = vmatpush1.msra.mxu0 %v410
    %1472 = vmatprep.subr.mxu0 %v415
    %1473 = vmatpush1.msra.mxu0 %v414
    %1474 = vmatprep.subr.mxu0 %v419
    %1475 = vmatpush1.msra.mxu0 %v418
    %1476 = vmatprep.subr.mxu0 %v423
    %1477 = vmatpush1.msra.mxu0 %v422
    %1478 = vmatprep.subr.mxu0 0.0
    %1479 = vmatpush1.msra.mxu0 0.0
    %1480 = vmatprep.subr.mxu0 0.0
    %1481 = vmatpush1.msra.mxu0 0.0
    %1482 = vmatprep.subr.mxu0 0.0
    %1483 = vmatpush1.msra.mxu0 0.0
    %1484 = vmatprep.subr.mxu0 0.0
    %1485 = vmatpush1.msra.mxu0 0.0
    %1486 = vmatprep.subr.mxu0 0.0
    %1487 = vmatpush1.msra.mxu0 0.0
    %1488 = vmatprep.subr.mxu0 0.0
    %1489 = vmatpush1.msra.mxu0 0.0
    %1490 = vmatprep.subr.mxu0 0.0
    %1491 = vmatpush1.msra.mxu0 0.0
    %1492 = vmatprep.subr.mxu0 0.0
    %1493 = vmatpush1.msra.mxu0 0.0
    %1494 = vmatprep.subr.mxu0 0.0
    %1495 = vmatpush1.msra.mxu0 0.0
    %1496 = vmatprep.subr.mxu0 0.0
    %1497 = vmatpush1.msra.mxu0 0.0
    %1498 = vmatprep.subr.mxu0 0.0
    %1499 = vmatpush1.msra.mxu0 0.0
    %1500 = vmatprep.subr.mxu0 0.0
    %1501 = vmatpush1.msra.mxu0 0.0
    %1502 = vmatprep.subr.mxu0 0.0
    %1503 = vmatpush1.msra.mxu0 0.0
    %1504 = vmatprep.subr.mxu0 0.0
    %1505 = vmatpush1.msra.mxu0 0.0
    %1506 = vmatprep.subr.mxu0 0.0
    %1507 = vmatpush1.msra.mxu0 0.0
    %1508 = vmatprep.subr.mxu0 0.0
    %1509 = vmatpush1.msra.mxu0 0.0
    %1510 = vmatprep.mubr.f32.mxu0 0.0
    %1511 = vmatmul.mubr.f32.gmra.mrb[0].mxu0 %v1445
    %v1512 = vpop.f32.mrb[0].mxu0
    %v1513 = vadd.f32 0.0, %v1512
    %v1514 = vpop.f32.mrb[0].mxu0
    %v1515 = vadd.f32 0.0, %v1514
    %1516 = vdwg.mxu0
    %1517 = vmatprep.subr.mxu0 %v365
    %1518 = vmatpush1.msra.mxu0 %v364
    %1519 = vmatprep.subr.mxu0 %v369
    %1520 = vmatpush1.msra.mxu0 %v368
    %1521 = vmatprep.subr.mxu0 %v373
    %1522 = vmatpush1.msra.mxu0 %v372
    %1523 = vmatprep.subr.mxu0 %v377
    %1524 = vmatpush1.msra.mxu0 %v376
    %1525 = vmatprep.subr.mxu0 %v381
    %1526 = vmatpush1.msra.mxu0 %v380
    %1527 = vmatprep.subr.mxu0 %v385
    %1528 = vmatpush1.msra.mxu0 %v384
    %1529 = vmatprep.subr.mxu0 %v389
    %1530 = vmatpush1.msra.mxu0 %v388
    %1531 = vmatprep.subr.mxu0 %v393
    %1532 = vmatpush1.msra.mxu0 %v392
    %1533 = vmatprep.subr.mxu0 %v397
    %1534 = vmatpush1.msra.mxu0 %v396
    %1535 = vmatprep.subr.mxu0 %v401
    %1536 = vmatpush1.msra.mxu0 %v400
    %1537 = vmatprep.subr.mxu0 %v405
    %1538 = vmatpush1.msra.mxu0 %v404
    %1539 = vmatprep.subr.mxu0 %v409
    %1540 = vmatpush1.msra.mxu0 %v408
    %1541 = vmatprep.subr.mxu0 %v413
    %1542 = vmatpush1.msra.mxu0 %v412
    %1543 = vmatprep.subr.mxu0 %v417
    %1544 = vmatpush1.msra.mxu0 %v416
    %1545 = vmatprep.subr.mxu0 %v421
    %1546 = vmatpush1.msra.mxu0 %v420
    %1547 = vmatprep.subr.mxu0 %v425
    %1548 = vmatpush1.msra.mxu0 %v424
    %1549 = vmatprep.subr.mxu0 0.0
    %1550 = vmatpush1.msra.mxu0 0.0
    %1551 = vmatprep.subr.mxu0 0.0
    %1552 = vmatpush1.msra.mxu0 0.0
    %1553 = vmatprep.subr.mxu0 0.0
    %1554 = vmatpush1.msra.mxu0 0.0
    %1555 = vmatprep.subr.mxu0 0.0
    %1556 = vmatpush1.msra.mxu0 0.0
    %1557 = vmatprep.subr.mxu0 0.0
    %1558 = vmatpush1.msra.mxu0 0.0
    %1559 = vmatprep.subr.mxu0 0.0
    %1560 = vmatpush1.msra.mxu0 0.0
    %1561 = vmatprep.subr.mxu0 0.0
    %1562 = vmatpush1.msra.mxu0 0.0
    %1563 = vmatprep.subr.mxu0 0.0
    %1564 = vmatpush1.msra.mxu0 0.0
    %1565 = vmatprep.subr.mxu0 0.0
    %1566 = vmatpush1.msra.mxu0 0.0
    %1567 = vmatprep.subr.mxu0 0.0
    %1568 = vmatpush1.msra.mxu0 0.0
    %1569 = vmatprep.subr.mxu0 0.0
    %1570 = vmatpush1.msra.mxu0 0.0
    %1571 = vmatprep.subr.mxu0 0.0
    %1572 = vmatpush1.msra.mxu0 0.0
    %1573 = vmatprep.subr.mxu0 0.0
    %1574 = vmatpush1.msra.mxu0 0.0
    %1575 = vmatprep.subr.mxu0 0.0
    %1576 = vmatpush1.msra.mxu0 0.0
    %1577 = vmatprep.subr.mxu0 0.0
    %1578 = vmatpush1.msra.mxu0 0.0
    %1579 = vmatprep.subr.mxu0 0.0
    %1580 = vmatpush1.msra.mxu0 0.0
    %1581 = vmatprep.mubr.f32.mxu0 0.0
    %1582 = vmatmul.mubr.f32.gmra.mrb[0].mxu0 %v1445
    %v1583 = vpop.f32.mrb[0].mxu0
    %v1584 = vadd.f32 0.0, %v1583
    %v1585 = vpop.f32.mrb[0].mxu0
    %v1586 = vadd.f32 0.0, %v1585
    %1587 = vdwg.mxu0
    %v1588 = vadd.f32 %v239, %v1513
    %v1589 = vadd.f32 %v241, %v1515
    %v1590 = vadd.f32 %v352, %v1584
    %v1591 = vadd.f32 %v354, %v1586
    %v1592 = vxor.u32 %v1588, 2147483648
    %v1593 = vmul.f32 %v1592, 1.442695
    %v1594 = vpow.pop %v1593
    %v1595 = vadd.f32 %v1594, 1.0
    %v1596 = vrcp.pop %v1595
    %v1597 = vmul.f32 1.0, %v1596
    %v1598 = vxor.u32 %v1589, 2147483648
    %v1599 = vmul.f32 %v1598, 1.442695
    %v1600 = vpow.pop %v1599
    %v1601 = vadd.f32 %v1600, 1.0
    %v1602 = vrcp.pop %v1601
    %v1603 = vmul.f32 1.0, %v1602
    %v1604 = vtanh.pop %v1590
    %v1605 = vxor.u32 %v1591, 2147483648
    %v1606 = vmul.f32 %v1605, 1.442695
    %v1607 = vpow.pop %v1606
    %v1608 = vadd.f32 %v1607, 1.0
    %v1609 = vrcp.pop %v1608
    %v1610 = vmul.f32 1.0, %v1609
    %v1611 = vmul.f32 %v1603, %v1443
    %v1612 = vmul.f32 %v1597, %v1604
    %v1613 = vadd.f32 %v1611, %v1612
    %v1614 = vtanh.pop %v1613
    %v1615 = vmul.f32 %v1610, %v1614
    %1616 = vmatprep.subr.mxu0 %v363
    %1617 = vmatpush1.msra.mxu0 %v362
    %1618 = vmatprep.subr.mxu0 %v367
    %1619 = vmatpush1.msra.mxu0 %v366
    %1620 = vmatprep.subr.mxu0 %v371
    %1621 = vmatpush1.msra.mxu0 %v370
    %1622 = vmatprep.subr.mxu0 %v375
    %1623 = vmatpush1.msra.mxu0 %v374
    %1624 = vmatprep.subr.mxu0 %v379
    %1625 = vmatpush1.msra.mxu0 %v378
    %1626 = vmatprep.subr.mxu0 %v383
    %1627 = vmatpush1.msra.mxu0 %v382
    %1628 = vmatprep.subr.mxu0 %v387
    %1629 = vmatpush1.msra.mxu0 %v386
    %1630 = vmatprep.subr.mxu0 %v391
    %1631 = vmatpush1.msra.mxu0 %v390
    %1632 = vmatprep.subr.mxu0 %v395
    %1633 = vmatpush1.msra.mxu0 %v394
    %1634 = vmatprep.subr.mxu0 %v399
    %1635 = vmatpush1.msra.mxu0 %v398
    %1636 = vmatprep.subr.mxu0 %v403
    %1637 = vmatpush1.msra.mxu0 %v402
    %1638 = vmatprep.subr.mxu0 %v407
    %1639 = vmatpush1.msra.mxu0 %v406
    %1640 = vmatprep.subr.mxu0 %v411
    %1641 = vmatpush1.msra.mxu0 %v410
    %1642 = vmatprep.subr.mxu0 %v415
    %1643 = vmatpush1.msra.mxu0 %v414
    %1644 = vmatprep.subr.mxu0 %v419
    %1645 = vmatpush1.msra.mxu0 %v418
    %1646 = vmatprep.subr.mxu0 %v423
    %1647 = vmatpush1.msra.mxu0 %v422
    %1648 = vmatprep.subr.mxu0 0.0
    %1649 = vmatpush1.msra.mxu0 0.0
    %1650 = vmatprep.subr.mxu0 0.0
    %1651 = vmatpush1.msra.mxu0 0.0
    %1652 = vmatprep.subr.mxu0 0.0
    %1653 = vmatpush1.msra.mxu0 0.0
    %1654 = vmatprep.subr.mxu0 0.0
    %1655 = vmatpush1.msra.mxu0 0.0
    %1656 = vmatprep.subr.mxu0 0.0
    %1657 = vmatpush1.msra.mxu0 0.0
    %1658 = vmatprep.subr.mxu0 0.0
    %1659 = vmatpush1.msra.mxu0 0.0
    %1660 = vmatprep.subr.mxu0 0.0
    %1661 = vmatpush1.msra.mxu0 0.0
    %1662 = vmatprep.subr.mxu0 0.0
    %1663 = vmatpush1.msra.mxu0 0.0
    %1664 = vmatprep.subr.mxu0 0.0
    %1665 = vmatpush1.msra.mxu0 0.0
    %1666 = vmatprep.subr.mxu0 0.0
    %1667 = vmatpush1.msra.mxu0 0.0
    %1668 = vmatprep.subr.mxu0 0.0
    %1669 = vmatpush1.msra.mxu0 0.0
    %1670 = vmatprep.subr.mxu0 0.0
    %1671 = vmatpush1.msra.mxu0 0.0
    %1672 = vmatprep.subr.mxu0 0.0
    %1673 = vmatpush1.msra.mxu0 0.0
    %1674 = vmatprep.subr.mxu0 0.0
    %1675 = vmatpush1.msra.mxu0 0.0
    %1676 = vmatprep.subr.mxu0 0.0
    %1677 = vmatpush1.msra.mxu0 0.0
    %1678 = vmatprep.subr.mxu0 0.0
    %1679 = vmatpush1.msra.mxu0 0.0
    %1680 = vmatprep.mubr.f32.mxu0 0.0
    %1681 = vmatmul.mubr.f32.gmra.mrb[0].mxu0 %v1615
    %v1682 = vpop.f32.mrb[0].mxu0
    %v1683 = vadd.f32 0.0, %v1682
    %v1684 = vpop.f32.mrb[0].mxu0
    %v1685 = vadd.f32 0.0, %v1684
    %1686 = vdwg.mxu0
    %1687 = vmatprep.subr.mxu0 %v365
    %1688 = vmatpush1.msra.mxu0 %v364
    %1689 = vmatprep.subr.mxu0 %v369
    %1690 = vmatpush1.msra.mxu0 %v368
    %1691 = vmatprep.subr.mxu0 %v373
    %1692 = vmatpush1.msra.mxu0 %v372
    %1693 = vmatprep.subr.mxu0 %v377
    %1694 = vmatpush1.msra.mxu0 %v376
    %1695 = vmatprep.subr.mxu0 %v381
    %1696 = vmatpush1.msra.mxu0 %v380
    %1697 = vmatprep.subr.mxu0 %v385
    %1698 = vmatpush1.msra.mxu0 %v384
    %1699 = vmatprep.subr.mxu0 %v389
    %1700 = vmatpush1.msra.mxu0 %v388
    %1701 = vmatprep.subr.mxu0 %v393
    %1702 = vmatpush1.msra.mxu0 %v392
    %1703 = vmatprep.subr.mxu0 %v397
    %1704 = vmatpush1.msra.mxu0 %v396
    %1705 = vmatprep.subr.mxu0 %v401
    %1706 = vmatpush1.msra.mxu0 %v400
    %1707 = vmatprep.subr.mxu0 %v405
    %1708 = vmatpush1.msra.mxu0 %v404
    %1709 = vmatprep.subr.mxu0 %v409
    %1710 = vmatpush1.msra.mxu0 %v408
    %1711 = vmatprep.subr.mxu0 %v413
    %1712 = vmatpush1.msra.mxu0 %v412
    %1713 = vmatprep.subr.mxu0 %v417
    %1714 = vmatpush1.msra.mxu0 %v416
    %1715 = vmatprep.subr.mxu0 %v421
    %1716 = vmatpush1.msra.mxu0 %v420
    %1717 = vmatprep.subr.mxu0 %v425
    %1718 = vmatpush1.msra.mxu0 %v424
    %1719 = vmatprep.subr.mxu0 0.0
    %1720 = vmatpush1.msra.mxu0 0.0
    %1721 = vmatprep.subr.mxu0 0.0
    %1722 = vmatpush1.msra.mxu0 0.0
    %1723 = vmatprep.subr.mxu0 0.0
    %1724 = vmatpush1.msra.mxu0 0.0
    %1725 = vmatprep.subr.mxu0 0.0
    %1726 = vmatpush1.msra.mxu0 0.0
    %1727 = vmatprep.subr.mxu0 0.0
    %1728 = vmatpush1.msra.mxu0 0.0
    %1729 = vmatprep.subr.mxu0 0.0
    %1730 = vmatpush1.msra.mxu0 0.0
    %1731 = vmatprep.subr.mxu0 0.0
    %1732 = vmatpush1.msra.mxu0 0.0
    %1733 = vmatprep.subr.mxu0 0.0
    %1734 = vmatpush1.msra.mxu0 0.0
    %1735 = vmatprep.subr.mxu0 0.0
    %1736 = vmatpush1.msra.mxu0 0.0
    %1737 = vmatprep.subr.mxu0 0.0
    %1738 = vmatpush1.msra.mxu0 0.0
    %1739 = vmatprep.subr.mxu0 0.0
    %1740 = vmatpush1.msra.mxu0 0.0
    %1741 = vmatprep.subr.mxu0 0.0
    %1742 = vmatpush1.msra.mxu0 0.0
    %1743 = vmatprep.subr.mxu0 0.0
    %1744 = vmatpush1.msra.mxu0 0.0
    %1745 = vmatprep.subr.mxu0 0.0
    %1746 = vmatpush1.msra.mxu0 0.0
    %1747 = vmatprep.subr.mxu0 0.0
    %1748 = vmatpush1.msra.mxu0 0.0
    %1749 = vmatprep.subr.mxu0 0.0
    %1750 = vmatpush1.msra.mxu0 0.0
    %1751 = vmatprep.mubr.f32.mxu0 0.0
    %1752 = vmatmul.mubr.f32.gmra.mrb[0].mxu0 %v1615
    %v1753 = vpop.f32.mrb[0].mxu0
    %v1754 = vadd.f32 0.0, %v1753
    %v1755 = vpop.f32.mrb[0].mxu0
    %v1756 = vadd.f32 0.0, %v1755
    %1757 = vdwg.mxu0
    %v1758 = vadd.f32 %v245, %v1683
    %v1759 = vadd.f32 %v247, %v1685
    %v1760 = vadd.f32 %v358, %v1754
    %v1761 = vadd.f32 %v360, %v1756
    %v1762 = vxor.u32 %v1758, 2147483648
    %v1763 = vmul.f32 %v1762, 1.442695
    %v1764 = vpow.pop %v1763
    %v1765 = vadd.f32 %v1764, 1.0
    %v1766 = vrcp.pop %v1765
    %v1767 = vmul.f32 1.0, %v1766
    %v1768 = vxor.u32 %v1759, 2147483648
    %v1769 = vmul.f32 %v1768, 1.442695
    %v1770 = vpow.pop %v1769
    %v1771 = vadd.f32 %v1770, 1.0
    %v1772 = vrcp.pop %v1771
    %v1773 = vmul.f32 1.0, %v1772
    %v1774 = vtanh.pop %v1760
    %v1775 = vxor.u32 %v1761, 2147483648
    %v1776 = vmul.f32 %v1775, 1.442695
    %v1777 = vpow.pop %v1776
    %v1778 = vadd.f32 %v1777, 1.0
    %v1779 = vrcp.pop %v1778
    %v1780 = vmul.f32 1.0, %v1779
    %v1781 = vmul.f32 %v1773, %v1613
    %v1782 = vmul.f32 %v1767, %v1774
    %v1783 = vadd.f32 %v1781, %v1782
    %v1784 = vtanh.pop %v1783
    %v1785 = vmul.f32 %v1780, %v1784
    %v1786 = vmax.f32 %v1785, 0.0
    %v1787 = vld [vmem:[#allocation7] sm:$0xff]
    %v1788 = vld [vmem:[#allocation7 + $0x8] sm:$0xff]
    %v1789 = vld [vmem:[#allocation7 + $0x10] sm:$0xff]
    %v1790 = vld [vmem:[#allocation7 + $0x18] sm:$0xff]
    %v1791 = vld [vmem:[#allocation7 + $0x20] sm:$0xff]
    %v1792 = vld [vmem:[#allocation7 + $0x28] sm:$0xff]
    %v1793 = vld [vmem:[#allocation7 + $0x30] sm:$0xff]
    %v1794 = vld [vmem:[#allocation7 + $0x38] sm:$0xff]
    %v1795 = vld [vmem:[#allocation7 + $0x40] sm:$0xff]
    %v1796 = vld [vmem:[#allocation7 + $0x48] sm:$0xff]
    %v1797 = vld [vmem:[#allocation7 + $0x50] sm:$0xff]
    %v1798 = vld [vmem:[#allocation7 + $0x58] sm:$0xff]
    %v1799 = vld [vmem:[#allocation7 + $0x60] sm:$0xff]
    %v1800 = vld [vmem:[#allocation7 + $0x68] sm:$0xff]
    %v1801 = vld [vmem:[#allocation7 + $0x70] sm:$0xff]
    %v1802 = vld [vmem:[#allocation7 + $0x78] sm:$0xff]
    %v1803 = vld [vmem:[%s5] sm:$0x1]
    %v1805 = vlaneseq
    %v1806 = vshrl.u32 %v1805, 7
    %v1807 = vsub.s32 0, %v1806
    %v1808 = vrot.slane %v1803, %v1807
    %1810 = vmatprep.subr.mxu0 0.0
    %1811 = vmatpush1.msra.mxu0 %v1787
    %1812 = vmatprep.subr.mxu0 0.0
    %1813 = vmatpush1.msra.mxu0 %v1788
    %1814 = vmatprep.subr.mxu0 0.0
    %1815 = vmatpush1.msra.mxu0 %v1789
    %1816 = vmatprep.subr.mxu0 0.0
    %1817 = vmatpush1.msra.mxu0 %v1790
    %1818 = vmatprep.subr.mxu0 0.0
    %1819 = vmatpush1.msra.mxu0 %v1791
    %1820 = vmatprep.subr.mxu0 0.0
    %1821 = vmatpush1.msra.mxu0 %v1792
    %1822 = vmatprep.subr.mxu0 0.0
    %1823 = vmatpush1.msra.mxu0 %v1793
    %1824 = vmatprep.subr.mxu0 0.0
    %1825 = vmatpush1.msra.mxu0 %v1794
    %1826 = vmatprep.subr.mxu0 0.0
    %1827 = vmatpush1.msra.mxu0 %v1795
    %1828 = vmatprep.subr.mxu0 0.0
    %1829 = vmatpush1.msra.mxu0 %v1796
    %1830 = vmatprep.subr.mxu0 0.0
    %1831 = vmatpush1.msra.mxu0 %v1797
    %1832 = vmatprep.subr.mxu0 0.0
    %1833 = vmatpush1.msra.mxu0 %v1798
    %1834 = vmatprep.subr.mxu0 0.0
    %1835 = vmatpush1.msra.mxu0 %v1799
    %1836 = vmatprep.subr.mxu0 0.0
    %1837 = vmatpush1.msra.mxu0 %v1800
    %1838 = vmatprep.subr.mxu0 0.0
    %1839 = vmatpush1.msra.mxu0 %v1801
    %1840 = vmatprep.subr.mxu0 0.0
    %1841 = vmatpush1.msra.mxu0 %v1802
    %1842 = vmatprep.subr.mxu0 0.0
    %1843 = vmatpush1.msra.mxu0 0.0
    %1844 = vmatprep.subr.mxu0 0.0
    %1845 = vmatpush1.msra.mxu0 0.0
    %1846 = vmatprep.subr.mxu0 0.0
    %1847 = vmatpush1.msra.mxu0 0.0
    %1848 = vmatprep.subr.mxu0 0.0
    %1849 = vmatpush1.msra.mxu0 0.0
    %1850 = vmatprep.subr.mxu0 0.0
    %1851 = vmatpush1.msra.mxu0 0.0
    %1852 = vmatprep.subr.mxu0 0.0
    %1853 = vmatpush1.msra.mxu0 0.0
    %1854 = vmatprep.subr.mxu0 0.0
    %1855 = vmatpush1.msra.mxu0 0.0
    %1856 = vmatprep.subr.mxu0 0.0
    %1857 = vmatpush1.msra.mxu0 0.0
    %1858 = vmatprep.subr.mxu0 0.0
    %1859 = vmatpush1.msra.mxu0 0.0
    %1860 = vmatprep.subr.mxu0 0.0
    %1861 = vmatpush1.msra.mxu0 0.0
    %1862 = vmatprep.subr.mxu0 0.0
    %1863 = vmatpush1.msra.mxu0 0.0
    %1864 = vmatprep.subr.mxu0 0.0
    %1865 = vmatpush1.msra.mxu0 0.0
    %1866 = vmatprep.subr.mxu0 0.0
    %1867 = vmatpush1.msra.mxu0 0.0
    %1868 = vmatprep.subr.mxu0 0.0
    %1869 = vmatpush1.msra.mxu0 0.0
    %1870 = vmatprep.subr.mxu0 0.0
    %1871 = vmatpush1.msra.mxu0 0.0
    %1872 = vmatprep.subr.mxu0 0.0
    %1873 = vmatpush1.msra.mxu0 0.0
    %1874 = vmatprep.mubr.f32.mxu0 0.0
    %1875 = vmatmul.mubr.f32.gmra.mrb[0].mxu0 %v1786
    %v1876 = vpop.f32.mrb[0].mxu0
    %v1877 = vadd.f32 %v1808, %v1876
    %v1878 = vpop.f32.mrb[0].mxu0
    %1879 = vdwg.mxu0
    %1880 = vmax.xlane.f32.xlu0 %v1877
    %v1881 = vpop.xlane.xlu0 %1880
    %v1882 = vsub.f32 %v1877, %v1881
    %v1883 = vmul.f32 %v1882, 1.442695
    %v1884 = vpow.pop %v1883
    %1885 = vadd.xlane.f32.xlu0 %v1884
    %v1886 = vpop.xlane.xlu0 %1885
    %v1887 = vrcp.pop %v1886
    %v1888 = vmul.f32 %v1884, %v1887
    %1889 = vst [vmem:[#allocation8] sm:$0xff] %v1888
    // Predicated region
    $region38: #{tpu_custom_call.1} parent=1 // pred_check
      _
    $region39: #{tpu_custom_call.1} parent=1 // pred_check_branch
      %1891 = sbr.rel (0) target = $region41
    $region40: #{tpu_custom_call.1} parent=1 // pred_region
      %s1893 = ssub.s32 128, 128
      %1894 = vsyncadd [#allocation4], %s1893
      %s1896 = sshll.u32 [#allocation8], 4
      %s1897 = int_to_ptr.vmem [resolvable:$true] %s1896
      %1899 = dma.vmem_to_hbm [thread:$0]  %s1897, 128, %s6, [#allocation4]
    $region41: #{tpu_custom_call.1} parent=1 // pred_fallthru
      _
    // Predicated region
    $region42: #{tpu_custom_call.1} parent=1 // pred_check
      _
    $region43: #{tpu_custom_call.1} parent=1 // pred_check_branch
      %1901 = sbr.rel (0) target = $region45
    $region44: #{tpu_custom_call.1} parent=1 // pred_region
      %1902 = dma.done [#allocation4], 128
    $region45: #{tpu_custom_call.1} parent=1 // pred_fallthru
      _
    %1903 = vsyncpa [#allocation3], 1
    %1904 = vsyncpa [#allocation6], 1
    %1905 = vsyncpa [#allocation4], 1

</llo_original>
